<compile_context>
chip_gen: v7x
topology: tpu7x:2x2x1
jax: 0.10.0
libtpu: 0.0.40
codegen_flags: <defaults>
</compile_context>

<pallas_src>
import numpy as np
import jax
import jax.numpy as jnp
from jax import lax
from jax.experimental import pallas as pl
from jax.experimental.pallas import tpu as pltpu


def _round_up(x, m):
    return ((x + m - 1) // m) * m


# ----------------------------------------------------------------------------
# Kernel 1: image + text encoders, projection heads, L2 norm (+ logit scale)
#   grid = (batch_tiles, K_tiles); K is the image-pixel contraction axis.
# ----------------------------------------------------------------------------
def encode_kernel(ls_ref, img_ref, w_ie_ref, b_ie_ref, ids_ref, emb_ref,
                  w_te_ref, b_te_ref, w_ip_ref, b_ip_ref, w_tp_ref, b_tp_ref,
                  img_n_ref, txt_n_ref, acc_ref):
    f32 = jnp.float32
    bf16 = jnp.bfloat16
    k = pl.program_id(1)
    nk = pl.num_programs(1)

    @pl.when(k == 0)
    def _():
        acc_ref[...] = jnp.zeros_like(acc_ref)

    # K-tiled stand-in image backbone: bf16 MXU operands, f32 accumulation.
    acc_ref[...] += jnp.dot(img_ref[...], w_ie_ref[...],
                            preferred_element_type=f32)

    @pl.when(k == nk - 1)
    def _():
        scale = ls_ref[0, 0]                      # learnable logit scale (SMEM)

        # ---- image head: bias, linear projection head, L2 norm (f32 VPU/EUP)
        img_feat = acc_ref[...] + b_ie_ref[...]
        img_p = jnp.dot(img_feat.astype(bf16), w_ip_ref[...],
                        preferred_element_type=f32) + b_ip_ref[...]
        img_ss = jnp.sum(img_p * img_p, axis=1, keepdims=True)
        # logit_scale folded into the image-side rsqrt factor; the where()
        # only keeps all-zero padding rows finite.
        img_n_ref[...] = img_p * jnp.where(img_ss > 0.0,
                                           scale * lax.rsqrt(img_ss), 0.0)

        # ---- stand-in text backbone: embedding mean-pool via one-hot counts.
        # TODO(synk): at real CLIP vocab (~49k, L=77) replace this with a
        # scalar-prefetch / DMA row-gather of the embedding table; the
        # one-hot trick is only cheap and VMEM-feasible for tiny V.
        ids = ids_ref[...]                        # single (TILE_B, L) load
        tb, seq_len = ids.shape
        vocab = emb_ref.shape[0]
        vocab_iota = lax.broadcasted_iota(jnp.int32, (tb, vocab), 1)
        counts = jnp.zeros((tb, vocab), jnp.int32)
        for l in range(seq_len):                  # static unroll, L is small
            counts = counts + (ids[:, l:l + 1] == vocab_iota).astype(jnp.int32)
        # counts are small exact integers -> exact in bf16 for the MXU.
        pooled = jnp.dot(counts.astype(bf16), emb_ref[...],
                         preferred_element_type=f32) * (1.0 / seq_len)
        txt_feat = jnp.dot(pooled.astype(bf16), w_te_ref[...],
                           preferred_element_type=f32) + b_te_ref[...]
        txt_p = jnp.dot(txt_feat.astype(bf16), w_tp_ref[...],
                        preferred_element_type=f32) + b_tp_ref[...]
        txt_ss = jnp.sum(txt_p * txt_p, axis=1, keepdims=True)
        txt_n_ref[...] = txt_p * jnp.where(txt_ss > 0.0,
                                           lax.rsqrt(txt_ss), 0.0)


# ----------------------------------------------------------------------------
# Kernel 2: tiled logits.  Writes logits_per_image[i, j] and the transposed
# logits_per_text tile to the swapped (j, i) block while it is VMEM-resident.
# ----------------------------------------------------------------------------
def logits_kernel(img_n_ref, txt_n_ref, lpi_ref, lpt_ref):
    a = img_n_ref[...].astype(jnp.bfloat16)       # (TILE_I, Dp), scale folded
    b = txt_n_ref[...].astype(jnp.bfloat16)       # (TILE_J, Dp)
    # A @ B^T expressed by contracting dim 1 of both operands (standard
    # q*k^T MXU form; no materialized transpose of the activations).
    tile = lax.dot_general(a, b, (((1,), (1,)), ((), ())),
                           preferred_element_type=jnp.float32)
    lpi_ref[...] = tile
    lpt_ref[...] = tile.T                         # exact transpose, in-VMEM


# ----------------------------------------------------------------------------
# Wrapper
# ----------------------------------------------------------------------------
@jax.jit
def clip_combined_forward(img, text_ids, logit_scale,
                          w_ie, b_ie, emb, w_te, b_te,
                          w_ip, b_ip, w_tp, b_tp):
    f32 = jnp.float32
    B = img.shape[0]
    Dp = w_ip.shape[1]                  # MXU-padded feature width (mult of 128)
    seq_len = text_ids.shape[1]
    vocab = emb.shape[0]

    img_flat = img.reshape(B, -1)
    K = img_flat.shape[1]
    K_pad = w_ie.shape[0]               # weights already padded to mult of 128

    # Tile-granular batch padding: multiple of 8 at small B (no 128-row
    # garbage text work), multiple of 128 once B is large enough that the
    # logits tiles can be lane-dense.
    B_pad = _round_up(B, 8) if B <= 128 else _round_up(B, 128)
    TILE_B = min(128, B_pad)
    TILE_K = 512 if K_pad % 512 == 0 else (256 if K_pad % 256 == 0 else 128)

    img_pd = jnp.pad(img_flat, ((0, B_pad - B), (0, K_pad - K))).astype(jnp.bfloat16)
    ids_pd = jnp.pad(text_ids.astype(jnp.int32), ((0, B_pad - B), (0, 0)))
    ls = jnp.reshape(logit_scale.astype(f32), (1, 1))

    nb = B_pad // TILE_B
    nk = K_pad // TILE_K

    smem_spec = pl.BlockSpec(memory_space=pltpu.MemorySpace.SMEM)

    def const(shape):                   # weights resident across the grid
        return pl.BlockSpec(shape, lambda b, k: (0, 0))

    enc_cost = pl.CostEstimate(
        flops=2 * B_pad * K_pad * Dp + 6 * B_pad * Dp * Dp + 2 * B_pad * vocab * Dp,
        transcendentals=2 * B_pad,
        bytes_accessed=(B_pad * K_pad * 2 + K_pad * Dp * 2 + vocab * Dp * 2
                        + 3 * Dp * Dp * 2 + 2 * B_pad * Dp * 4))

    img_n, txt_n = pl.pallas_call(
        encode_kernel,
        grid=(nb, nk),
        in_specs=[
            smem_spec,                                                   # logit_scale
            pl.BlockSpec((TILE_B, TILE_K), lambda b, k: (b, k)),         # img (streamed)
            pl.BlockSpec((TILE_K, Dp), lambda b, k: (k, 0)),             # w_img_enc
            const((1, Dp)),                                              # b_img_enc
            pl.BlockSpec((TILE_B, seq_len), lambda b, k: (b, 0)),        # ids
            const((vocab, Dp)),                                          # emb table
            const((Dp, Dp)), const((1, Dp)),                             # w/b txt enc
            const((Dp, Dp)), const((1, Dp)),                             # w/b img proj
            const((Dp, Dp)), const((1, Dp)),                             # w/b txt proj
        ],
        out_specs=(
            pl.BlockSpec((TILE_B, Dp), lambda b, k: (b, 0)),
            pl.BlockSpec((TILE_B, Dp), lambda b, k: (b, 0)),
        ),
        out_shape=(
            jax.ShapeDtypeStruct((B_pad, Dp), f32),
            jax.ShapeDtypeStruct((B_pad, Dp), f32),
        ),
        scratch_shapes=[pltpu.VMEM((TILE_B, Dp), f32)],
        compiler_params=pltpu.CompilerParams(
            dimension_semantics=("parallel", "arbitrary"),
            vmem_limit_bytes=48 * 1024 * 1024),     # headroom vs v7x 64 MiB
        cost_estimate=enc_cost,
    )(ls, img_pd, w_ie, b_ie, ids_pd, emb, w_te, b_te, w_ip, b_ip, w_tp, b_tp)

    # ------------------------------------------------------------------ logits
    TILE_I = TILE_B
    TILE_J = TILE_B     # == B_pad (full) at small B, else 128 -> lane-dense
    ni = B_pad // TILE_I
    nj = B_pad // TILE_J

    log_cost = pl.CostEstimate(
        flops=4 * B_pad * B_pad * Dp,
        transcendentals=0,
        bytes_accessed=2 * B_pad * Dp * 4 + 2 * B_pad * B_pad * 4)

    lpi_pad, lpt_pad = pl.pallas_call(
        logits_kernel,
        grid=(ni, nj),
        in_specs=[
            pl.BlockSpec((TILE_I, Dp), lambda i, j: (i, 0)),
            pl.BlockSpec((TILE_J, Dp), lambda i, j: (j, 0)),
        ],
        out_specs=(
            pl.BlockSpec((TILE_I, TILE_J), lambda i, j: (i, j)),
            pl.BlockSpec((TILE_J, TILE_I), lambda i, j: (j, i)),   # transposed blocks
        ),
        out_shape=(
            jax.ShapeDtypeStruct((B_pad, B_pad), f32),
            jax.ShapeDtypeStruct((B_pad, B_pad), f32),
        ),
        compiler_params=pltpu.CompilerParams(
            dimension_semantics=("parallel", "parallel"),
            vmem_limit_bytes=48 * 1024 * 1024),
        cost_estimate=log_cost,
    )(img_n, txt_n)

    return lpi_pad[:B, :B], lpt_pad[:B, :B]


# ----------------------------------------------------------------------------
# Parameter init (deterministic; mimics xavier_uniform_ + zero bias).
# Weights are stored pre-transposed as (in, out), zero-padded to the MXU width
# (feature dim -> multiple of 128), and kept in bf16 for the MXU.
# ----------------------------------------------------------------------------
def xavier_uniform(key, in_dim, out_dim):
    bound = float(np.sqrt(6.0 / (in_dim + out_dim)))
    return jax.random.uniform(key, (in_dim, out_dim), jnp.float32,
                              minval=-bound, maxval=bound)


def _pad_to(x, rows, cols):
    return jnp.pad(x, ((0, rows - x.shape[0]), (0, cols - x.shape[1])))


class CLIPCombinedModifiedPallas:
    """layer_type_image='linear', layer_type_text='linear'."""

    def __init__(self, key, *, img_c=4, img_h=16, img_w=16,
                 embed_dim=32, vocab=32):
        ks = jax.random.split(key, 5)
        self.embed_dim = embed_dim
        in_img = img_c * img_h * img_w
        Dp = _round_up(embed_dim, 128)        # pad feature dim to MXU width
        Kp = _round_up(in_img, 128)
        bf16, f32 = jnp.bfloat16, jnp.float32

        # stand-in CLIP backbone params (external modules in the original)
        self.w_img_enc = _pad_to(xavier_uniform(ks[0], in_img, embed_dim),
                                 Kp, Dp).astype(bf16)
        self.b_img_enc = jnp.zeros((1, Dp), f32)
        self.emb_table = _pad_to(jax.random.normal(ks[1], (vocab, embed_dim),
                                                   f32) * 0.02,
                                 vocab, Dp).astype(bf16)
        self.w_txt_enc = _pad_to(xavier_uniform(ks[2], embed_dim, embed_dim),
                                 Dp, Dp).astype(bf16)
        self.b_txt_enc = jnp.zeros((1, Dp), f32)

        # projection heads (the actual module params): xavier + zero bias
        self.w_img_proj = _pad_to(xavier_uniform(ks[3], embed_dim, embed_dim),
                                  Dp, Dp).astype(bf16)
        self.b_img_proj = jnp.zeros((1, Dp), f32)
        self.w_txt_proj = _pad_to(xavier_uniform(ks[4], embed_dim, embed_dim),
                                  Dp, Dp).astype(bf16)
        self.b_txt_proj = jnp.zeros((1, Dp), f32)

        # logit_scale = exp(log(1/0.07)); plumbed as a runtime SMEM scalar.
        self.logit_scale = jnp.exp(jnp.float32(np.log(1.0 / 0.07)))

    def __call__(self, img, text_ids):
        return clip_combined_forward(
            img, text_ids, self.logit_scale,
            self.w_img_enc, self.b_img_enc, self.emb_table,
            self.w_txt_enc, self.b_txt_enc,
            self.w_img_proj, self.b_img_proj,
            self.w_txt_proj, self.b_txt_proj)


# ----------------------------------------------------------------------------
# Pure-JAX reference of the same math (same bf16 MXU-operand casts).
# ----------------------------------------------------------------------------
def ref_forward(m, img, text):
    f32, bf16 = jnp.float32, jnp.bfloat16
    B = img.shape[0]
    Kp = m.w_img_enc.shape[0]
    imgf = img.reshape(B, -1)
    imgf = jnp.pad(imgf, ((0, 0), (0, Kp - imgf.shape[1]))).astype(bf16)

    img_feat = jnp.dot(imgf, m.w_img_enc, preferred_element_type=f32) + m.b_img_enc
    img_p = jnp.dot(img_feat.astype(bf16), m.w_img_proj,
                    preferred_element_type=f32) + m.b_img_proj

    pooled = jnp.mean(m.emb_table.astype(f32)[text], axis=1)
    txt_feat = jnp.dot(pooled.astype(bf16), m.w_txt_enc,
                       preferred_element_type=f32) + m.b_txt_enc
    txt_p = jnp.dot(txt_feat.astype(bf16), m.w_txt_proj,
                    preferred_element_type=f32) + m.b_txt_proj

    ipn = img_p / jnp.linalg.norm(img_p, axis=1, keepdims=True)
    tpn = txt_p / jnp.linalg.norm(txt_p, axis=1, keepdims=True)
    a = (ipn * m.logit_scale).astype(bf16)
    b = tpn.astype(bf16)
    lpi = jnp.dot(a, b.T, preferred_element_type=f32)
    return lpi, lpi.T


# ----------------------------------------------------------------------------
# Main
# ----------------------------------------------------------------------------
if __name__ == "__main__":
    key = jax.random.PRNGKey(0)
    k_model, k_img, k_txt = jax.random.split(key, 3)

    B, C, H, W = 2, 4, 16, 16
    L, D, V = 8, 32, 32

    model = CLIPCombinedModifiedPallas(k_model, img_c=C, img_h=H, img_w=W,
                                       embed_dim=D, vocab=V)

    img = jax.random.normal(k_img, (B, C, H, W), jnp.float32)        # NCHW
    text = jax.random.randint(k_txt, (B, L), 0, V, dtype=jnp.int32)

    logits_per_image, logits_per_text = model(img, text)
    jax.block_until_ready((logits_per_image, logits_per_text))

    ref_lpi, ref_lpt = ref_forward(model, img, text)
    assert logits_per_image.shape == (B, B) and logits_per_text.shape == (B, B)
    np.testing.assert_allclose(np.asarray(logits_per_image),
                               np.asarray(ref_lpi), rtol=1e-2, atol=1e-2)
    np.testing.assert_allclose(np.asarray(logits_per_text),
                               np.asarray(ref_lpt), rtol=1e-2, atol=1e-2)

    print("KERNEL_OK")
</pallas_src>

<mosaic_0001>
module attributes {stable_mosaic.version = 11 : i64} {
  func.func @encode_kernel(%arg0: i32, %arg1: i32, %arg2: memref<1x1xf32, #tpu.memory_space<smem>>, %arg3: memref<8x512xbf16, #tpu.memory_space<vmem>>, %arg4: memref<512x128xbf16, #tpu.memory_space<vmem>>, %arg5: memref<1x128xf32, #tpu.memory_space<vmem>>, %arg6: memref<8x8xi32, #tpu.memory_space<vmem>>, %arg7: memref<32x128xbf16, #tpu.memory_space<vmem>>, %arg8: memref<128x128xbf16, #tpu.memory_space<vmem>>, %arg9: memref<1x128xf32, #tpu.memory_space<vmem>>, %arg10: memref<128x128xbf16, #tpu.memory_space<vmem>>, %arg11: memref<1x128xf32, #tpu.memory_space<vmem>>, %arg12: memref<128x128xbf16, #tpu.memory_space<vmem>>, %arg13: memref<1x128xf32, #tpu.memory_space<vmem>>, %arg14: memref<8x128xf32, #tpu.memory_space<vmem>>, %arg15: memref<8x128xf32, #tpu.memory_space<vmem>>, %arg16: memref<8x128xf32, #tpu.memory_space<vmem>>) attributes {dimension_semantics = [#tpu.dimension_semantics<parallel>, #tpu.dimension_semantics<arbitrary>], iteration_bounds = array<i64: 1, 2>, scalar_prefetch = 0 : i64, scratch_operands = 1 : i64, tpu.core_type = #tpu.core_type<tc>, window_params = [{transform_indices = @transform_0, window_bounds = array<i64: 1, 1>}, {transform_indices = @transform_1, window_bounds = array<i64: 8, 512>}, {transform_indices = @transform_2, window_bounds = array<i64: 512, 128>}, {pipeline_mode = #tpu.pipeline_mode<synchronous>, transform_indices = @transform_3, window_bounds = array<i64: 1, 128>}, {transform_indices = @transform_4, window_bounds = array<i64: 8, 8>}, {pipeline_mode = #tpu.pipeline_mode<synchronous>, transform_indices = @transform_5, window_bounds = array<i64: 32, 128>}, {pipeline_mode = #tpu.pipeline_mode<synchronous>, transform_indices = @transform_6, window_bounds = array<i64: 128, 128>}, {pipeline_mode = #tpu.pipeline_mode<synchronous>, transform_indices = @transform_7, window_bounds = array<i64: 1, 128>}, {pipeline_mode = #tpu.pipeline_mode<synchronous>, transform_indices = @transform_8, window_bounds = array<i64: 128, 128>}, {pipeline_mode = #tpu.pipeline_mode<synchronous>, transform_indices = @transform_9, window_bounds = array<i64: 1, 128>}, {pipeline_mode = #tpu.pipeline_mode<synchronous>, transform_indices = @transform_10, window_bounds = array<i64: 128, 128>}, {pipeline_mode = #tpu.pipeline_mode<synchronous>, transform_indices = @transform_11, window_bounds = array<i64: 1, 128>}, {transform_indices = @transform_12, window_bounds = array<i64: 8, 128>}, {transform_indices = @transform_13, window_bounds = array<i64: 8, 128>}]} {
    %c0_i32 = arith.constant 0 : i32
    %0 = arith.cmpi eq, %arg1, %c0_i32 : i32
    %1 = arith.extui %0 : i1 to i32
    %c0_i32_0 = arith.constant 0 : i32
    %2 = arith.cmpi ne, %1, %c0_i32_0 : i32
    scf.if %2 {
      %cst_9 = arith.constant 0.000000e+00 : f32
      %12 = vector.broadcast %cst_9 : f32 to vector<8x128xf32>
      %c0_10 = arith.constant 0 : index
      %c0_11 = arith.constant 0 : index
      %13 = vector.load %arg16[%c0_10, %c0_11] : memref<8x128xf32, #tpu.memory_space<vmem>>, vector<8x128xf32>
      tpu.vector_store %arg16[%c0_10, %c0_11], %12 {strides = array<i32>} : memref<8x128xf32, #tpu.memory_space<vmem>>, vector<8x128xf32>,
    } else {
    }
    %c0 = arith.constant 0 : index
    %c0_1 = arith.constant 0 : index
    %3 = vector.load %arg16[%c0, %c0_1] : memref<8x128xf32, #tpu.memory_space<vmem>>, vector<8x128xf32>
    %c0_2 = arith.constant 0 : index
    %c0_3 = arith.constant 0 : index
    %4 = vector.load %arg3[%c0_2, %c0_3] : memref<8x512xbf16, #tpu.memory_space<vmem>>, vector<8x512xbf16>
    %c0_4 = arith.constant 0 : index
    %c0_5 = arith.constant 0 : index
    %5 = vector.load %arg4[%c0_4, %c0_5] : memref<512x128xbf16, #tpu.memory_space<vmem>>, vector<512x128xbf16>
    %cst = arith.constant dense<0.000000e+00> : vector<8x128xf32>
    %6 = tpu.matmul %4, %5, %cst {dimension_numbers = #tpu.dot_dimension_numbers<[1], [0], [0], [1], [0, 0, 1, 1], [], []>} : vector<8x512xbf16>, vector<512x128xbf16>, vector<8x128xf32> -> vector<8x128xf32>
    %7 = arith.addf %3, %6 : vector<8x128xf32>
    %c0_6 = arith.constant 0 : index
    %c0_7 = arith.constant 0 : index
    %8 = vector.load %arg16[%c0_6, %c0_7] : memref<8x128xf32, #tpu.memory_space<vmem>>, vector<8x128xf32>
    tpu.vector_store %arg16[%c0_6, %c0_7], %7 {strides = array<i32>} : memref<8x128xf32, #tpu.memory_space<vmem>>, vector<8x128xf32>,
    %c1_i32 = arith.constant 1 : i32
    %9 = arith.cmpi eq, %arg1, %c1_i32 : i32
    %10 = arith.extui %9 : i1 to i32
    %c0_i32_8 = arith.constant 0 : i32
    %11 = arith.cmpi ne, %10, %c0_i32_8 : i32
    scf.if %11 {
      %c0_9 = arith.constant 0 : index
      %c0_10 = arith.constant 0 : index
      %12 = memref.load %arg2[%c0_9, %c0_10] : memref<1x1xf32, #tpu.memory_space<smem>>
      %c0_11 = arith.constant 0 : index
      %c0_12 = arith.constant 0 : index
      %13 = vector.load %arg16[%c0_11, %c0_12] : memref<8x128xf32, #tpu.memory_space<vmem>>, vector<8x128xf32>
      %c0_13 = arith.constant 0 : index
      %c0_14 = arith.constant 0 : index
      %14 = vector.load %arg5[%c0_13, %c0_14] : memref<1x128xf32, #tpu.memory_space<vmem>>, vector<1x128xf32>
      %15 = vector.broadcast %14 : vector<1x128xf32> to vector<8x128xf32>
      %16 = arith.addf %13, %15 : vector<8x128xf32>
      %17 = arith.truncf %16 : vector<8x128xf32> to vector<8x128xbf16>
      %c0_15 = arith.constant 0 : index
      %c0_16 = arith.constant 0 : index
      %18 = vector.load %arg10[%c0_15, %c0_16] : memref<128x128xbf16, #tpu.memory_space<vmem>>, vector<128x128xbf16>
      %cst_17 = arith.constant dense<0.000000e+00> : vector<8x128xf32>
      %19 = tpu.matmul %17, %18, %cst_17 {dimension_numbers = #tpu.dot_dimension_numbers<[1], [0], [0], [1], [0, 0, 1, 1], [], []>} : vector<8x128xbf16>, vector<128x128xbf16>, vector<8x128xf32> -> vector<8x128xf32>
      %c0_18 = arith.constant 0 : index
      %c0_19 = arith.constant 0 : index
      %20 = vector.load %arg11[%c0_18, %c0_19] : memref<1x128xf32, #tpu.memory_space<vmem>>, vector<1x128xf32>
      %21 = vector.broadcast %20 : vector<1x128xf32> to vector<8x128xf32>
      %22 = arith.addf %19, %21 : vector<8x128xf32>
      %23 = arith.mulf %22, %22 : vector<8x128xf32>
      %cst_20 = arith.constant dense<0.000000e+00> : vector<8xf32>
      %24 = vector.multi_reduction <add>, %23, %cst_20 [1] : vector<8x128xf32> to vector<8xf32>
      %25 = vector.shape_cast %24 : vector<8xf32> to vector<8x1xf32>
      %cst_21 = arith.constant 0.000000e+00 : f32
      %26 = vector.broadcast %cst_21 : f32 to vector<8x1xf32>
      %27 = arith.cmpf ogt, %25, %26 : vector<8x1xf32>
      %28 = math.rsqrt %25 : vector<8x1xf32>
      %29 = vector.broadcast %12 : f32 to vector<8x1xf32>
      %30 = arith.mulf %29, %28 : vector<8x1xf32>
      %cst_22 = arith.constant 0.000000e+00 : f32
      %31 = vector.broadcast %cst_22 : f32 to vector<8x1xf32>
      %32 = arith.select %27, %30, %31 : vector<8x1xi1>, vector<8x1xf32>
      %33 = vector.broadcast %32 : vector<8x1xf32> to vector<8x128xf32>
      %34 = arith.mulf %22, %33 : vector<8x128xf32>
      %c0_23 = arith.constant 0 : index
      %c0_24 = arith.constant 0 : index
      %35 = vector.load %arg14[%c0_23, %c0_24] : memref<8x128xf32, #tpu.memory_space<vmem>>, vector<8x128xf32>
      tpu.vector_store %arg14[%c0_23, %c0_24], %34 {strides = array<i32>} : memref<8x128xf32, #tpu.memory_space<vmem>>, vector<8x128xf32>,
      %c0_25 = arith.constant 0 : index
      %c0_26 = arith.constant 0 : index
      %36 = vector.load %arg6[%c0_25, %c0_26] : memref<8x8xi32, #tpu.memory_space<vmem>>, vector<8x8xi32>
      %37 = tpu.iota {dimensions = array<i32: 1>} : vector<8x32xi32>
      %c0_i32_27 = arith.constant 0 : i32
      %38 = vector.broadcast %c0_i32_27 : i32 to vector<8x32xi32>
      %39 = vector.extract_strided_slice %36 {offsets = [0, 0], sizes = [8, 1], strides = [1, 1]} : vector<8x8xi32> to vector<8x1xi32>
      %40 = vector.broadcast %39 : vector<8x1xi32> to vector<8x32xi32>
      %41 = arith.cmpi eq, %40, %37 : vector<8x32xi32>
      %42 = arith.extui %41 : vector<8x32xi1> to vector<8x32xi32>
      %43 = arith.addi %38, %42 : vector<8x32xi32>
      %44 = vector.extract_strided_slice %36 {offsets = [0, 1], sizes = [8, 1], strides = [1, 1]} : vector<8x8xi32> to vector<8x1xi32>
      %45 = vector.broadcast %44 : vector<8x1xi32> to vector<8x32xi32>
      %46 = arith.cmpi eq, %45, %37 : vector<8x32xi32>
      %47 = arith.extui %46 : vector<8x32xi1> to vector<8x32xi32>
      %48 = arith.addi %43, %47 : vector<8x32xi32>
      %49 = vector.extract_strided_slice %36 {offsets = [0, 2], sizes = [8, 1], strides = [1, 1]} : vector<8x8xi32> to vector<8x1xi32>
      %50 = vector.broadcast %49 : vector<8x1xi32> to vector<8x32xi32>
      %51 = arith.cmpi eq, %50, %37 : vector<8x32xi32>
      %52 = arith.extui %51 : vector<8x32xi1> to vector<8x32xi32>
      %53 = arith.addi %48, %52 : vector<8x32xi32>
      %54 = vector.extract_strided_slice %36 {offsets = [0, 3], sizes = [8, 1], strides = [1, 1]} : vector<8x8xi32> to vector<8x1xi32>
      %55 = vector.broadcast %54 : vector<8x1xi32> to vector<8x32xi32>
      %56 = arith.cmpi eq, %55, %37 : vector<8x32xi32>
      %57 = arith.extui %56 : vector<8x32xi1> to vector<8x32xi32>
      %58 = arith.addi %53, %57 : vector<8x32xi32>
      %59 = vector.extract_strided_slice %36 {offsets = [0, 4], sizes = [8, 1], strides = [1, 1]} : vector<8x8xi32> to vector<8x1xi32>
      %60 = vector.broadcast %59 : vector<8x1xi32> to vector<8x32xi32>
      %61 = arith.cmpi eq, %60, %37 : vector<8x32xi32>
      %62 = arith.extui %61 : vector<8x32xi1> to vector<8x32xi32>
      %63 = arith.addi %58, %62 : vector<8x32xi32>
      %64 = vector.extract_strided_slice %36 {offsets = [0, 5], sizes = [8, 1], strides = [1, 1]} : vector<8x8xi32> to vector<8x1xi32>
      %65 = vector.broadcast %64 : vector<8x1xi32> to vector<8x32xi32>
      %66 = arith.cmpi eq, %65, %37 : vector<8x32xi32>
      %67 = arith.extui %66 : vector<8x32xi1> to vector<8x32xi32>
      %68 = arith.addi %63, %67 : vector<8x32xi32>
      %69 = vector.extract_strided_slice %36 {offsets = [0, 6], sizes = [8, 1], strides = [1, 1]} : vector<8x8xi32> to vector<8x1xi32>
      %70 = vector.broadcast %69 : vector<8x1xi32> to vector<8x32xi32>
      %71 = arith.cmpi eq, %70, %37 : vector<8x32xi32>
      %72 = arith.extui %71 : vector<8x32xi1> to vector<8x32xi32>
      %73 = arith.addi %68, %72 : vector<8x32xi32>
      %74 = vector.extract_strided_slice %36 {offsets = [0, 7], sizes = [8, 1], strides = [1, 1]} : vector<8x8xi32> to vector<8x1xi32>
      %75 = vector.broadcast %74 : vector<8x1xi32> to vector<8x32xi32>
      %76 = arith.cmpi eq, %75, %37 : vector<8x32xi32>
      %77 = arith.extui %76 : vector<8x32xi1> to vector<8x32xi32>
      %78 = arith.addi %73, %77 : vector<8x32xi32>
      %79 = arith.sitofp %78 : vector<8x32xi32> to vector<8x32xbf16>
      %c0_28 = arith.constant 0 : index
      %c0_29 = arith.constant 0 : index
      %80 = vector.load %arg7[%c0_28, %c0_29] : memref<32x128xbf16, #tpu.memory_space<vmem>>, vector<32x128xbf16>
      %cst_30 = arith.constant dense<0.000000e+00> : vector<8x128xf32>
      %81 = tpu.matmul %79, %80, %cst_30 {dimension_numbers = #tpu.dot_dimension_numbers<[1], [0], [0], [1], [0, 0, 1, 1], [], []>} : vector<8x32xbf16>, vector<32x128xbf16>, vector<8x128xf32> -> vector<8x128xf32>
      %cst_31 = arith.constant 1.250000e-01 : f32
      %82 = vector.broadcast %cst_31 : f32 to vector<8x128xf32>
      %83 = arith.mulf %81, %82 : vector<8x128xf32>
      %84 = arith.truncf %83 : vector<8x128xf32> to vector<8x128xbf16>
      %c0_32 = arith.constant 0 : index
      %c0_33 = arith.constant 0 : index
      %85 = vector.load %arg8[%c0_32, %c0_33] : memref<128x128xbf16, #tpu.memory_space<vmem>>, vector<128x128xbf16>
      %cst_34 = arith.constant dense<0.000000e+00> : vector<8x128xf32>
      %86 = tpu.matmul %84, %85, %cst_34 {dimension_numbers = #tpu.dot_dimension_numbers<[1], [0], [0], [1], [0, 0, 1, 1], [], []>} : vector<8x128xbf16>, vector<128x128xbf16>, vector<8x128xf32> -> vector<8x128xf32>
      %c0_35 = arith.constant 0 : index
      %c0_36 = arith.constant 0 : index
      %87 = vector.load %arg9[%c0_35, %c0_36] : memref<1x128xf32, #tpu.memory_space<vmem>>, vector<1x128xf32>
      %88 = vector.broadcast %87 : vector<1x128xf32> to vector<8x128xf32>
      %89 = arith.addf %86, %88 : vector<8x128xf32>
      %90 = arith.truncf %89 : vector<8x128xf32> to vector<8x128xbf16>
      %c0_37 = arith.constant 0 : index
      %c0_38 = arith.constant 0 : index
      %91 = vector.load %arg12[%c0_37, %c0_38] : memref<128x128xbf16, #tpu.memory_space<vmem>>, vector<128x128xbf16>
      %cst_39 = arith.constant dense<0.000000e+00> : vector<8x128xf32>
      %92 = tpu.matmul %90, %91, %cst_39 {dimension_numbers = #tpu.dot_dimension_numbers<[1], [0], [0], [1], [0, 0, 1, 1], [], []>} : vector<8x128xbf16>, vector<128x128xbf16>, vector<8x128xf32> -> vector<8x128xf32>
      %c0_40 = arith.constant 0 : index
      %c0_41 = arith.constant 0 : index
      %93 = vector.load %arg13[%c0_40, %c0_41] : memref<1x128xf32, #tpu.memory_space<vmem>>, vector<1x128xf32>
      %94 = vector.broadcast %93 : vector<1x128xf32> to vector<8x128xf32>
      %95 = arith.addf %92, %94 : vector<8x128xf32>
      %96 = arith.mulf %95, %95 : vector<8x128xf32>
      %cst_42 = arith.constant dense<0.000000e+00> : vector<8xf32>
      %97 = vector.multi_reduction <add>, %96, %cst_42 [1] : vector<8x128xf32> to vector<8xf32>
      %98 = vector.shape_cast %97 : vector<8xf32> to vector<8x1xf32>
      %cst_43 = arith.constant 0.000000e+00 : f32
      %99 = vector.broadcast %cst_43 : f32 to vector<8x1xf32>
      %100 = arith.cmpf ogt, %98, %99 : vector<8x1xf32>
      %101 = math.rsqrt %98 : vector<8x1xf32>
      %cst_44 = arith.constant 0.000000e+00 : f32
      %102 = vector.broadcast %cst_44 : f32 to vector<8x1xf32>
      %103 = arith.select %100, %101, %102 : vector<8x1xi1>, vector<8x1xf32>
      %104 = vector.broadcast %103 : vector<8x1xf32> to vector<8x128xf32>
      %105 = arith.mulf %95, %104 : vector<8x128xf32>
      %c0_45 = arith.constant 0 : index
      %c0_46 = arith.constant 0 : index
      %106 = vector.load %arg15[%c0_45, %c0_46] : memref<8x128xf32, #tpu.memory_space<vmem>>, vector<8x128xf32>
      tpu.vector_store %arg15[%c0_45, %c0_46], %105 {strides = array<i32>} : memref<8x128xf32, #tpu.memory_space<vmem>>, vector<8x128xf32>,
    } else {
    }
    return
  }
  func.func @transform_0(%arg0: i32, %arg1: i32) -> (i32, i32) {
    %c0_i32 = arith.constant 0 : i32
    %c0_i32_0 = arith.constant 0 : i32
    %c0_i32_1 = arith.constant 0 : i32
    return %c0_i32, %c0_i32_0 : i32, i32
  }
  func.func @transform_1(%arg0: i32, %arg1: i32) -> (i32, i32) {
    %c0_i32 = arith.constant 0 : i32
    return %arg0, %arg1 : i32, i32
  }
  func.func @transform_2(%arg0: i32, %arg1: i32) -> (i32, i32) {
    %c0_i32 = arith.constant 0 : i32
    %c0_i32_0 = arith.constant 0 : i32
    return %arg1, %c0_i32 : i32, i32
  }
  func.func @transform_3(%arg0: i32, %arg1: i32) -> (i32, i32) {
    %c0_i32 = arith.constant 0 : i32
    %c0_i32_0 = arith.constant 0 : i32
    %c0_i32_1 = arith.constant 0 : i32
    return %c0_i32, %c0_i32_0 : i32, i32
  }
  func.func @transform_4(%arg0: i32, %arg1: i32) -> (i32, i32) {
    %c0_i32 = arith.constant 0 : i32
    %c0_i32_0 = arith.constant 0 : i32
    return %arg0, %c0_i32 : i32, i32
  }
  func.func @transform_5(%arg0: i32, %arg1: i32) -> (i32, i32) {
    %c0_i32 = arith.constant 0 : i32
    %c0_i32_0 = arith.constant 0 : i32
    %c0_i32_1 = arith.constant 0 : i32
    return %c0_i32, %c0_i32_0 : i32, i32
  }
  func.func @transform_6(%arg0: i32, %arg1: i32) -> (i32, i32) {
    %c0_i32 = arith.constant 0 : i32
    %c0_i32_0 = arith.constant 0 : i32
    %c0_i32_1 = arith.constant 0 : i32
    return %c0_i32, %c0_i32_0 : i32, i32
  }
  func.func @transform_7(%arg0: i32, %arg1: i32) -> (i32, i32) {
    %c0_i32 = arith.constant 0 : i32
    %c0_i32_0 = arith.constant 0 : i32
    %c0_i32_1 = arith.constant 0 : i32
    return %c0_i32, %c0_i32_0 : i32, i32
  }
  func.func @transform_8(%arg0: i32, %arg1: i32) -> (i32, i32) {
    %c0_i32 = arith.constant 0 : i32
    %c0_i32_0 = arith.constant 0 : i32
    %c0_i32_1 = arith.constant 0 : i32
    return %c0_i32, %c0_i32_0 : i32, i32
  }
  func.func @transform_9(%arg0: i32, %arg1: i32) -> (i32, i32) {
    %c0_i32 = arith.constant 0 : i32
    %c0_i32_0 = arith.constant 0 : i32
    %c0_i32_1 = arith.constant 0 : i32
    return %c0_i32, %c0_i32_0 : i32, i32
  }
  func.func @transform_10(%arg0: i32, %arg1: i32) -> (i32, i32) {
    %c0_i32 = arith.constant 0 : i32
    %c0_i32_0 = arith.constant 0 : i32
    %c0_i32_1 = arith.constant 0 : i32
    return %c0_i32, %c0_i32_0 : i32, i32
  }
  func.func @transform_11(%arg0: i32, %arg1: i32) -> (i32, i32) {
    %c0_i32 = arith.constant 0 : i32
    %c0_i32_0 = arith.constant 0 : i32
    %c0_i32_1 = arith.constant 0 : i32
    return %c0_i32, %c0_i32_0 : i32, i32
  }
  func.func @transform_12(%arg0: i32, %arg1: i32) -> (i32, i32) {
    %c0_i32 = arith.constant 0 : i32
    %c0_i32_0 = arith.constant 0 : i32
    return %arg0, %c0_i32 : i32, i32
  }
  func.func @transform_13(%arg0: i32, %arg1: i32) -> (i32, i32) {
    %c0_i32 = arith.constant 0 : i32
    %c0_i32_0 = arith.constant 0 : i32
    return %arg0, %c0_i32 : i32, i32
  }
}

module attributes {stable_mosaic.version = 11 : i64} {
  func.func @logits_kernel(%arg0: i32, %arg1: i32, %arg2: memref<8x128xf32, #tpu.memory_space<vmem>>, %arg3: memref<8x128xf32, #tpu.memory_space<vmem>>, %arg4: memref<8x8xf32, #tpu.memory_space<vmem>>, %arg5: memref<8x8xf32, #tpu.memory_space<vmem>>) attributes {dimension_semantics = [#tpu.dimension_semantics<parallel>, #tpu.dimension_semantics<parallel>], iteration_bounds = array<i64: 1, 1>, scalar_prefetch = 0 : i64, scratch_operands = 0 : i64, tpu.core_type = #tpu.core_type<tc>, window_params = [{transform_indices = @transform_0, window_bounds = array<i64: 8, 128>}, {transform_indices = @transform_1, window_bounds = array<i64: 8, 128>}, {transform_indices = @transform_2, window_bounds = array<i64: 8, 8>}, {transform_indices = @transform_3, window_bounds = array<i64: 8, 8>}]} {
    %c0 = arith.constant 0 : index
    %c0_0 = arith.constant 0 : index
    %0 = vector.load %arg2[%c0, %c0_0] : memref<8x128xf32, #tpu.memory_space<vmem>>, vector<8x128xf32>
    %1 = arith.truncf %0 : vector<8x128xf32> to vector<8x128xbf16>
    %c0_1 = arith.constant 0 : index
    %c0_2 = arith.constant 0 : index
    %2 = vector.load %arg3[%c0_1, %c0_2] : memref<8x128xf32, #tpu.memory_space<vmem>>, vector<8x128xf32>
    %3 = arith.truncf %2 : vector<8x128xf32> to vector<8x128xbf16>
    %cst = arith.constant dense<0.000000e+00> : vector<8x8xf32>
    %4 = tpu.matmul %1, %3, %cst {dimension_numbers = #tpu.dot_dimension_numbers<[1], [1], [0], [0], [0, 0, 1, 0], [], []>} : vector<8x128xbf16>, vector<8x128xbf16>, vector<8x8xf32> -> vector<8x8xf32>
    %c0_3 = arith.constant 0 : index
    %c0_4 = arith.constant 0 : index
    %5 = vector.load %arg4[%c0_3, %c0_4] : memref<8x8xf32, #tpu.memory_space<vmem>>, vector<8x8xf32>
    tpu.vector_store %arg4[%c0_3, %c0_4], %4 {strides = array<i32>} : memref<8x8xf32, #tpu.memory_space<vmem>>, vector<8x8xf32>,
    %6 = tpu.transpose %4, [1, 0] : vector<8x8xf32> -> vector<8x8xf32>
    %c0_5 = arith.constant 0 : index
    %c0_6 = arith.constant 0 : index
    %7 = vector.load %arg5[%c0_5, %c0_6] : memref<8x8xf32, #tpu.memory_space<vmem>>, vector<8x8xf32>
    tpu.vector_store %arg5[%c0_5, %c0_6], %6 {strides = array<i32>} : memref<8x8xf32, #tpu.memory_space<vmem>>, vector<8x8xf32>,
    return
  }
  func.func @transform_0(%arg0: i32, %arg1: i32) -> (i32, i32) {
    %c0_i32 = arith.constant 0 : i32
    %c0_i32_0 = arith.constant 0 : i32
    return %arg0, %c0_i32 : i32, i32
  }
  func.func @transform_1(%arg0: i32, %arg1: i32) -> (i32, i32) {
    %c0_i32 = arith.constant 0 : i32
    %c0_i32_0 = arith.constant 0 : i32
    return %arg1, %c0_i32 : i32, i32
  }
  func.func @transform_2(%arg0: i32, %arg1: i32) -> (i32, i32) {
    %c0_i32 = arith.constant 0 : i32
    return %arg0, %arg1 : i32, i32
  }
  func.func @transform_3(%arg0: i32, %arg1: i32) -> (i32, i32) {
    %c0_i32 = arith.constant 0 : i32
    return %arg1, %arg0 : i32, i32
  }
}

</mosaic_0001>

<llo_original>
// kernel: clip_combined_forward.3
$region0: #{clip_combined_forward.3}
  #allocation0 [shape = 'u32[]', space=smem, size = 0x4, offset = 0x4, fixed_abs, tag = 'smem constant byte address 0x4 - core index']
  #allocation1 [shape = 'u32[144,128]{1,0:T(1,128)}', space=vmem, size = 0x12000, scoped, tag = 'internal scratch']
  %s0 = inlined_call_operand.vmem [shape: f32[8,128], index: 0, kind: input, shape index: {}]
  %s1 = inlined_call_operand.vmem [shape: f32[8,128], index: 1, kind: input, shape index: {}]
  %s2 = inlined_call_operand.vmem [shape: f32[8,8], index: 2, kind: output, shape index: {0}]
  %s3 = inlined_call_operand.vmem [shape: f32[8,8], index: 3, kind: output, shape index: {1}]
  %4 = xla_tuple %s2, %s3
  %s5 = sld [smem:[#allocation0]]
  $region26: #{clip_combined_forward.3} parent=0
    _
  %s7 = ssub.s32 1, %s5
  %s8 = scalar_select 0, %s7, %s5
  // Predicated region
  $region2: #{clip_combined_forward.3} parent=0 // pred_check
    _
  $region3: #{clip_combined_forward.3} parent=0 // pred_check_branch
    %10 = sbr.rel (0) target = $region5
  $region4: #{clip_combined_forward.3} parent=0 // pred_region
    _
  $region5: #{clip_combined_forward.3} parent=0 // pred_fallthru
    _
  // Predicated region
  $region6: #{clip_combined_forward.3} parent=0 // pred_check
    _
  $region7: #{clip_combined_forward.3} parent=0 // pred_check_branch
    %12 = sbr.rel (0) target = $region9
  $region8: #{clip_combined_forward.3} parent=0 // pred_region
    _
  $region9: #{clip_combined_forward.3} parent=0 // pred_fallthru
    _
  %v14 = vld [vmem:[%s0] sm:$0xff]
  %v15 = vpack.c.bf16 %v14, %v14
  %v16 = vld [vmem:[%s1] sm:$0xff]
  %v17 = vpack.c.bf16 %v16, %v16
  %18 = vmatprep.subr.bf16.mxu0 0
  %19 = vmatpush1.bf16.xpose.msra.mxu0 %v17
  %20 = vmatprep.subr.bf16.mxu0 0
  %21 = vmatpush1.bf16.xpose.msra.mxu0 0
  %22 = vmatprep.subr.bf16.mxu0 0
  %23 = vmatpush1.bf16.xpose.msra.mxu0 0
  %24 = vmatprep.subr.bf16.mxu0 0
  %25 = vmatpush1.bf16.xpose.msra.mxu0 0
  %26 = vmatprep.subr.bf16.mxu0 0
  %27 = vmatpush1.bf16.xpose.msra.mxu0 0
  %28 = vmatprep.subr.bf16.mxu0 0
  %29 = vmatpush1.bf16.xpose.msra.mxu0 0
  %30 = vmatprep.subr.bf16.mxu0 0
  %31 = vmatpush1.bf16.xpose.msra.mxu0 0
  %32 = vmatprep.subr.bf16.mxu0 0
  %33 = vmatpush1.bf16.xpose.msra.mxu0 0
  %34 = vmatprep.subr.bf16.mxu0 0
  %35 = vmatpush1.bf16.xpose.msra.mxu0 0
  %36 = vmatprep.subr.bf16.mxu0 0
  %37 = vmatpush1.bf16.xpose.msra.mxu0 0
  %38 = vmatprep.subr.bf16.mxu0 0
  %39 = vmatpush1.bf16.xpose.msra.mxu0 0
  %40 = vmatprep.subr.bf16.mxu0 0
  %41 = vmatpush1.bf16.xpose.msra.mxu0 0
  %42 = vmatprep.subr.bf16.mxu0 0
  %43 = vmatpush1.bf16.xpose.msra.mxu0 0
  %44 = vmatprep.subr.bf16.mxu0 0
  %45 = vmatpush1.bf16.xpose.msra.mxu0 0
  %46 = vmatprep.subr.bf16.mxu0 0
  %47 = vmatpush1.bf16.xpose.msra.mxu0 0
  %48 = vmatprep.subr.bf16.mxu0 0
  %49 = vmatpush1.bf16.xpose.msra.mxu0 0
  %50 = vmatprep.mubr.bf16.mxu0 0
  %51 = vmatmul.mubr.bf16.gmra.mrb[0].mxu0 %v15
  %v52 = vpop.f32.mrb[0].mxu0
  %v53 = vadd.f32 0.0, %v52
  %v54 = vpop.f32.mrb[0].mxu0
  %v55 = vpop.f32.mrb[0].mxu0
  %v56 = vpop.f32.mrb[0].mxu0
  %57 = vdwg.mxu0
  %vm58 = vcmask 64512
  %59 = vst.msk [vmem:[%s2] sm:$0xff] %vm58, %v53
  %60 = vxpose.xlu0.b32.start [1/16] %v53, 128
  %61 = vxpose.xlu0.b32.cont [2/16] 0.0, 128
  %62 = vxpose.xlu0.b32.cont [3/16] 0.0, 128
  %63 = vxpose.xlu0.b32.cont [4/16] 0.0, 128
  %64 = vxpose.xlu0.b32.cont [5/16] 0.0, 128
  %65 = vxpose.xlu0.b32.cont [6/16] 0.0, 128
  %66 = vxpose.xlu0.b32.cont [7/16] 0.0, 128
  %67 = vxpose.xlu0.b32.cont [8/16] 0.0, 128
  %68 = vxpose.xlu0.b32.cont [9/16] 0.0, 128
  %69 = vxpose.xlu0.b32.cont [10/16] 0.0, 128
  %70 = vxpose.xlu0.b32.cont [11/16] 0.0, 128
  %71 = vxpose.xlu0.b32.cont [12/16] 0.0, 128
  %72 = vxpose.xlu0.b32.cont [13/16] 0.0, 128
  %73 = vxpose.xlu0.b32.cont [14/16] 0.0, 128
  %74 = vxpose.xlu0.b32.cont [15/16] 0.0, 128
  %75 = vxpose.xlu0.b32.end [16/16] 0.0, 128
  %v76 = vpop.trf.xlu0
  %v77 = vpop.trf.xlu0
  %v78 = vpop.trf.xlu0
  %v79 = vpop.trf.xlu0
  %v80 = vpop.trf.xlu0
  %v81 = vpop.trf.xlu0
  %v82 = vpop.trf.xlu0
  %v83 = vpop.trf.xlu0
  %v84 = vpop.trf.xlu0
  %v85 = vpop.trf.xlu0
  %v86 = vpop.trf.xlu0
  %v87 = vpop.trf.xlu0
  %v88 = vpop.trf.xlu0
  %v89 = vpop.trf.xlu0
  %v90 = vpop.trf.xlu0
  %v91 = vpop.trf.xlu0
  %92 = vst.msk [vmem:[%s3] sm:$0xff] %vm58, %v76
  // Predicated region
  $region10: #{clip_combined_forward.3} parent=0 // pred_check
    _
  $region11: #{clip_combined_forward.3} parent=0 // pred_check_branch
    %94 = sbr.rel (0) target = $region13
  $region12: #{clip_combined_forward.3} parent=0 // pred_region
    _
  $region13: #{clip_combined_forward.3} parent=0 // pred_fallthru
    _
  // Predicated region
  $region14: #{clip_combined_forward.3} parent=0 // pred_check
    _
  $region15: #{clip_combined_forward.3} parent=0 // pred_check_branch
    %96 = sbr.rel (0) target = $region17
  $region16: #{clip_combined_forward.3} parent=0 // pred_region
    _
  $region17: #{clip_combined_forward.3} parent=0 // pred_fallthru
    _
  // Predicated region
  $region18: #{clip_combined_forward.3} parent=0 // pred_check
    _
  $region19: #{clip_combined_forward.3} parent=0 // pred_check_branch
    %98 = sbr.rel (0) target = $region21
  $region20: #{clip_combined_forward.3} parent=0 // pred_region
    _
  $region21: #{clip_combined_forward.3} parent=0 // pred_fallthru
    _
  // Predicated region
  $region22: #{clip_combined_forward.3} parent=0 // pred_check
    _
  $region23: #{clip_combined_forward.3} parent=0 // pred_check_branch
    %100 = sbr.rel (0) target = $region25
  $region24: #{clip_combined_forward.3} parent=0 // pred_region
    _
  $region25: #{clip_combined_forward.3} parent=0 // pred_fallthru
    _

// kernel: clip_combined_forward.2
$region0: #{clip_combined_forward.2}
  #allocation0 [shape = 'u32[]', space=smem, size = 0x4, offset = 0x4, fixed_abs, tag = 'smem constant byte address 0x4 - core index']
  #allocation1 [shape = 'u32[144,128]{1,0:T(1,128)}', space=vmem, size = 0x12000, scoped, tag = 'internal scratch']
  #allocation2 [shape = 'f32[8,128]{1,0:T(8,128)}', space=vmem, size = 0x1000, scoped, tag = 'scratch operand']
  #allocation3 [shape = 'f32[1,1]{1,0:T(1,128)S(6)}', space=smem, size = 0x200, scoped, tag = 'scoped memory for clip_combined_forward.2']
  %s0 = inlined_call_operand.<no memory space> [shape: f32[1,1], index: 0, kind: input, shape index: {}]
  %s1 = inlined_call_operand.vmem [shape: bf16[8,1024], index: 1, kind: input, shape index: {}]
  %s2 = inlined_call_operand.hbm [shape: bf16[1024,128], index: 2, kind: input, shape index: {}]
  %s3 = inlined_call_operand.vmem [shape: f32[1,128], index: 3, kind: input, shape index: {}]
  %s4 = inlined_call_operand.vmem [shape: s32[8,8], index: 4, kind: input, shape index: {}]
  %s5 = inlined_call_operand.vmem [shape: bf16[32,128], index: 5, kind: input, shape index: {}]
  %s6 = inlined_call_operand.vmem [shape: bf16[128,128], index: 6, kind: input, shape index: {}]
  %s7 = inlined_call_operand.vmem [shape: f32[1,128], index: 7, kind: input, shape index: {}]
  %s8 = inlined_call_operand.vmem [shape: bf16[128,128], index: 8, kind: input, shape index: {}]
  %s9 = inlined_call_operand.vmem [shape: f32[1,128], index: 9, kind: input, shape index: {}]
  %s10 = inlined_call_operand.vmem [shape: bf16[128,128], index: 10, kind: input, shape index: {}]
  %s11 = inlined_call_operand.vmem [shape: f32[1,128], index: 11, kind: input, shape index: {}]
  %s12 = inlined_call_operand.vmem [shape: f32[8,128], index: 12, kind: output, shape index: {0}]
  %s13 = inlined_call_operand.vmem [shape: f32[8,128], index: 13, kind: output, shape index: {1}]
  %14 = xla_tuple %s12, %s13
  %s15 = sld [smem:[#allocation0]]
  $region101: #{clip_combined_forward.2} parent=0
    _
  %s17 = ssub.s32 1, %s15
  %s18 = scalar_select 0, %s17, %s15
  %19 = sst [smem:[#allocation3]] %s0
  $region1: #{clip_combined_forward.2} parent=0
    #allocation4 [shape = 'u8[262144]{0}', space=vmem, size = 0x40000, scoped, tag = 'input window, operand 2']
    #allocation5 [shape = 's32[2]{0}', space=sflag, size = 0x8, scoped, tag = 'scoped memory for clip_combined_forward.2']
    %20 = vsyncpa [#allocation5], 0
    %s21 = scalar_lea.sflag [#allocation5], 1
    %22 = vsyncpa %s21, 0
    loop: start=0, step=1, limit=4
    $region2: #{clip_combined_forward.2} parent=1 // loop_pre_header
      _
    $region3: #{clip_combined_forward.2} parent=1 // loop_header
      %s24 = sphi 0, %s28
      %p25 = scmp.ge.s32.totalorder %s24, 4
      %s31 = sphi 0, %s43
      %s32 = sphi 0, %s39
      %s33 = sphi 0, %s31
      %s34 = sphi 0, %s32
      %s35 = sphi 0, %s33
      %s36 = sphi 0, %s34
      %s44 = sphi 0, %s44
      %s46 = sphi 0, %s44
      %s47 = sphi 0, %s46
      %s61 = sphi 0, %s47
      %s69 = sphi 0, %s71
      %s72 = sphi 0, %s69
      %s73 = sphi 0, %s72
      %s89 = sphi 0, %s73
      %s95 = sphi 0, %s97
      %s98 = sphi 0, %s95
      %s99 = sphi 0, %s98
      %s115 = sphi 0, %s99
      %s119 = sphi 0, %s119
      %s121 = sphi 0, %s119
      %s122 = sphi 0, %s121
      %s136 = sphi 0, %s122
      %s142 = sphi 0, %s144
      %s145 = sphi 0, %s142
      %s146 = sphi 0, %s145
      %s162 = sphi 0, %s146
      %s166 = sphi 0, %s166
      %s168 = sphi 0, %s166
      %s169 = sphi 0, %s168
      %s183 = sphi 0, %s169
      %s187 = sphi 0, %s187
      %s189 = sphi 0, %s187
      %s190 = sphi 0, %s189
      %s204 = sphi 0, %s190
      %s208 = sphi 0, %s208
      %s210 = sphi 0, %s208
      %s211 = sphi 0, %s210
      %s225 = sphi 0, %s211
      %s229 = sphi 0, %s229
      %s231 = sphi 0, %s229
      %s232 = sphi 0, %s231
      %s246 = sphi 0, %s232
      %s250 = sphi 0, %s250
      %s252 = sphi 0, %s250
      %s253 = sphi 0, %s252
      %s267 = sphi 0, %s253
      %s271 = sphi 0, %s271
      %s273 = sphi 0, %s271
      %s274 = sphi 0, %s273
      %s288 = sphi 0, %s274
      %s292 = sphi 0, %s292
      %s294 = sphi 0, %s292
      %s295 = sphi 0, %s294
      %s309 = sphi 0, %s295
      %s315 = sphi 0, %s317
      %s318 = sphi 0, %s315
      %s319 = sphi 0, %s318
      %s335 = sphi 0, %s319
      %s341 = sphi 0, %s343
      %s344 = sphi 0, %s341
      %s345 = sphi 0, %s344
      %s361 = sphi 0, %s345
    $region4: #{clip_combined_forward.2} parent=1 // loop_header_branch
      %27 = sbr.rel (%p25) target = $region8
    $region5: #{clip_combined_forward.2} parent=1 // loop_body
      %s29 = ssub.s32 %s24, 1
      %s30 = ssub.s32 %s24, 2
      %s37 = sadd.s32 1, %s32
      %p38 = scmp.ge.s32.totalorder %s37, 2
      %s39 = scalar_select %p38, 0, %s37
      %s40 = sadd.s32 1, %s31
      %s41 = scalar_select %p38, %s40, %s31
      %p42 = scmp.ge.s32.totalorder %s41, 1
      %s43 = scalar_select %p42, 0, %s41
      %s45 = sadd.s32 %s44, 1
      %p48 = scmp.eq.s32.totalorder %s24, 1
      %p49 = scmp.ne.s32.totalorder %s44, %s46
      %p50 = scmp.eq.s32.totalorder %s24, 0
      %p51 = por %p49, %p50
      %p52 = scmp.ne.s32.totalorder %s44, %s46
      %p53 = scmp.eq.s32.totalorder %s29, 1
      %p54 = por %p52, %p53
      %p55 = scmp.ne.s32.totalorder %s46, %s47
      %p56 = scmp.eq.s32.totalorder %s29, 0
      %p57 = por %p55, %p56
      %p58 = scmp.ne.s32.totalorder %s46, %s47
      %p59 = scmp.eq.s32.totalorder %s30, 1
      %p60 = por %p58, %p59
      %p62 = scmp.ne.s32.totalorder %s47, %s61
      %p63 = scmp.eq.s32.totalorder %s30, 0
      %p64 = por %p62, %p63
      %s65 = ssub.s32 %s31, %s43
      %s66 = ssub.s32 %s32, %s39
      %s67 = sor.u32 %s65, %s66
      %p68 = scmp.eq.s32.totalorder %s67, 0
      %s70 = sadd.s32 %s69, 1
      %s71 = scalar_select %p68, %s69, %s70
      %p74 = pneg %p68
      %p75 = scmp.eq.s32.totalorder %s24, 1
      %p76 = por %p74, %p75
      %p77 = scmp.ne.s32.totalorder %s69, %s72
      %p78 = scmp.eq.s32.totalorder %s24, 0
      %p79 = por %p77, %p78
      %p80 = scmp.ne.s32.totalorder %s69, %s72
      %p81 = scmp.eq.s32.totalorder %s29, 1
      %p82 = por %p80, %p81
      %p83 = scmp.ne.s32.totalorder %s72, %s73
      %p84 = scmp.eq.s32.totalorder %s29, 0
      %p85 = por %p83, %p84
      %p86 = scmp.ne.s32.totalorder %s72, %s73
      %p87 = scmp.eq.s32.totalorder %s30, 1
      %p88 = por %p86, %p87
      %p90 = scmp.ne.s32.totalorder %s73, %s89
      %p91 = scmp.eq.s32.totalorder %s30, 0
      %p92 = por %p90, %p91
      %s93 = ssub.s32 %s32, %s39
      %p94 = scmp.eq.s32.totalorder %s93, 0
      %s96 = sadd.s32 %s95, 1
      %s97 = scalar_select %p94, %s95, %s96
      %p100 = pneg %p94
      %p101 = scmp.eq.s32.totalorder %s24, 1
      %p102 = por %p100, %p101
      %p103 = scmp.ne.s32.totalorder %s95, %s98
      %p104 = scmp.eq.s32.totalorder %s24, 0
      %p105 = por %p103, %p104
      %p106 = scmp.ne.s32.totalorder %s95, %s98
      %p107 = scmp.eq.s32.totalorder %s29, 1
      %p108 = por %p106, %p107
      %p109 = scmp.ne.s32.totalorder %s98, %s99
      %p110 = scmp.eq.s32.totalorder %s29, 0
      %p111 = por %p109, %p110
      %p112 = scmp.ne.s32.totalorder %s98, %s99
      %p113 = scmp.eq.s32.totalorder %s30, 1
      %p114 = por %p112, %p113
      %p116 = scmp.ne.s32.totalorder %s99, %s115
      %p117 = scmp.eq.s32.totalorder %s30, 0
      %p118 = por %p116, %p117
      %s120 = sadd.s32 %s119, 1
      %p123 = scmp.eq.s32.totalorder %s24, 1
      %p124 = scmp.ne.s32.totalorder %s119, %s121
      %p125 = scmp.eq.s32.totalorder %s24, 0
      %p126 = por %p124, %p125
      %p127 = scmp.ne.s32.totalorder %s119, %s121
      %p128 = scmp.eq.s32.totalorder %s29, 1
      %p129 = por %p127, %p128
      %p130 = scmp.ne.s32.totalorder %s121, %s122
      %p131 = scmp.eq.s32.totalorder %s29, 0
      %p132 = por %p130, %p131
      %p133 = scmp.ne.s32.totalorder %s121, %s122
      %p134 = scmp.eq.s32.totalorder %s30, 1
      %p135 = por %p133, %p134
      %p137 = scmp.ne.s32.totalorder %s122, %s136
      %p138 = scmp.eq.s32.totalorder %s30, 0
      %p139 = por %p137, %p138
      %s140 = ssub.s32 %s31, %s43
      %p141 = scmp.eq.s32.totalorder %s140, 0
      %s143 = sadd.s32 %s142, 1
      %s144 = scalar_select %p141, %s142, %s143
      %p147 = pneg %p141
      %p148 = scmp.eq.s32.totalorder %s24, 1
      %p149 = por %p147, %p148
      %p150 = scmp.ne.s32.totalorder %s142, %s145
      %p151 = scmp.eq.s32.totalorder %s24, 0
      %p152 = por %p150, %p151
      %p153 = scmp.ne.s32.totalorder %s142, %s145
      %p154 = scmp.eq.s32.totalorder %s29, 1
      %p155 = por %p153, %p154
      %p156 = scmp.ne.s32.totalorder %s145, %s146
      %p157 = scmp.eq.s32.totalorder %s29, 0
      %p158 = por %p156, %p157
      %p159 = scmp.ne.s32.totalorder %s145, %s146
      %p160 = scmp.eq.s32.totalorder %s30, 1
      %p161 = por %p159, %p160
      %p163 = scmp.ne.s32.totalorder %s146, %s162
      %p164 = scmp.eq.s32.totalorder %s30, 0
      %p165 = por %p163, %p164
      %s167 = sadd.s32 %s166, 1
      %p170 = scmp.eq.s32.totalorder %s24, 1
      %p171 = scmp.ne.s32.totalorder %s166, %s168
      %p172 = scmp.eq.s32.totalorder %s24, 0
      %p173 = por %p171, %p172
      %p174 = scmp.ne.s32.totalorder %s166, %s168
      %p175 = scmp.eq.s32.totalorder %s29, 1
      %p176 = por %p174, %p175
      %p177 = scmp.ne.s32.totalorder %s168, %s169
      %p178 = scmp.eq.s32.totalorder %s29, 0
      %p179 = por %p177, %p178
      %p180 = scmp.ne.s32.totalorder %s168, %s169
      %p181 = scmp.eq.s32.totalorder %s30, 1
      %p182 = por %p180, %p181
      %p184 = scmp.ne.s32.totalorder %s169, %s183
      %p185 = scmp.eq.s32.totalorder %s30, 0
      %p186 = por %p184, %p185
      %s188 = sadd.s32 %s187, 1
      %p191 = scmp.eq.s32.totalorder %s24, 1
      %p192 = scmp.ne.s32.totalorder %s187, %s189
      %p193 = scmp.eq.s32.totalorder %s24, 0
      %p194 = por %p192, %p193
      %p195 = scmp.ne.s32.totalorder %s187, %s189
      %p196 = scmp.eq.s32.totalorder %s29, 1
      %p197 = por %p195, %p196
      %p198 = scmp.ne.s32.totalorder %s189, %s190
      %p199 = scmp.eq.s32.totalorder %s29, 0
      %p200 = por %p198, %p199
      %p201 = scmp.ne.s32.totalorder %s189, %s190
      %p202 = scmp.eq.s32.totalorder %s30, 1
      %p203 = por %p201, %p202
      %p205 = scmp.ne.s32.totalorder %s190, %s204
      %p206 = scmp.eq.s32.totalorder %s30, 0
      %p207 = por %p205, %p206
      %s209 = sadd.s32 %s208, 1
      %p212 = scmp.eq.s32.totalorder %s24, 1
      %p213 = scmp.ne.s32.totalorder %s208, %s210
      %p214 = scmp.eq.s32.totalorder %s24, 0
      %p215 = por %p213, %p214
      %p216 = scmp.ne.s32.totalorder %s208, %s210
      %p217 = scmp.eq.s32.totalorder %s29, 1
      %p218 = por %p216, %p217
      %p219 = scmp.ne.s32.totalorder %s210, %s211
      %p220 = scmp.eq.s32.totalorder %s29, 0
      %p221 = por %p219, %p220
      %p222 = scmp.ne.s32.totalorder %s210, %s211
      %p223 = scmp.eq.s32.totalorder %s30, 1
      %p224 = por %p222, %p223
      %p226 = scmp.ne.s32.totalorder %s211, %s225
      %p227 = scmp.eq.s32.totalorder %s30, 0
      %p228 = por %p226, %p227
      %s230 = sadd.s32 %s229, 1
      %p233 = scmp.eq.s32.totalorder %s24, 1
      %p234 = scmp.ne.s32.totalorder %s229, %s231
      %p235 = scmp.eq.s32.totalorder %s24, 0
      %p236 = por %p234, %p235
      %p237 = scmp.ne.s32.totalorder %s229, %s231
      %p238 = scmp.eq.s32.totalorder %s29, 1
      %p239 = por %p237, %p238
      %p240 = scmp.ne.s32.totalorder %s231, %s232
      %p241 = scmp.eq.s32.totalorder %s29, 0
      %p242 = por %p240, %p241
      %p243 = scmp.ne.s32.totalorder %s231, %s232
      %p244 = scmp.eq.s32.totalorder %s30, 1
      %p245 = por %p243, %p244
      %p247 = scmp.ne.s32.totalorder %s232, %s246
      %p248 = scmp.eq.s32.totalorder %s30, 0
      %p249 = por %p247, %p248
      %s251 = sadd.s32 %s250, 1
      %p254 = scmp.eq.s32.totalorder %s24, 1
      %p255 = scmp.ne.s32.totalorder %s250, %s252
      %p256 = scmp.eq.s32.totalorder %s24, 0
      %p257 = por %p255, %p256
      %p258 = scmp.ne.s32.totalorder %s250, %s252
      %p259 = scmp.eq.s32.totalorder %s29, 1
      %p260 = por %p258, %p259
      %p261 = scmp.ne.s32.totalorder %s252, %s253
      %p262 = scmp.eq.s32.totalorder %s29, 0
      %p263 = por %p261, %p262
      %p264 = scmp.ne.s32.totalorder %s252, %s253
      %p265 = scmp.eq.s32.totalorder %s30, 1
      %p266 = por %p264, %p265
      %p268 = scmp.ne.s32.totalorder %s253, %s267
      %p269 = scmp.eq.s32.totalorder %s30, 0
      %p270 = por %p268, %p269
      %s272 = sadd.s32 %s271, 1
      %p275 = scmp.eq.s32.totalorder %s24, 1
      %p276 = scmp.ne.s32.totalorder %s271, %s273
      %p277 = scmp.eq.s32.totalorder %s24, 0
      %p278 = por %p276, %p277
      %p279 = scmp.ne.s32.totalorder %s271, %s273
      %p280 = scmp.eq.s32.totalorder %s29, 1
      %p281 = por %p279, %p280
      %p282 = scmp.ne.s32.totalorder %s273, %s274
      %p283 = scmp.eq.s32.totalorder %s29, 0
      %p284 = por %p282, %p283
      %p285 = scmp.ne.s32.totalorder %s273, %s274
      %p286 = scmp.eq.s32.totalorder %s30, 1
      %p287 = por %p285, %p286
      %p289 = scmp.ne.s32.totalorder %s274, %s288
      %p290 = scmp.eq.s32.totalorder %s30, 0
      %p291 = por %p289, %p290
      %s293 = sadd.s32 %s292, 1
      %p296 = scmp.eq.s32.totalorder %s24, 1
      %p297 = scmp.ne.s32.totalorder %s292, %s294
      %p298 = scmp.eq.s32.totalorder %s24, 0
      %p299 = por %p297, %p298
      %p300 = scmp.ne.s32.totalorder %s292, %s294
      %p301 = scmp.eq.s32.totalorder %s29, 1
      %p302 = por %p300, %p301
      %p303 = scmp.ne.s32.totalorder %s294, %s295
      %p304 = scmp.eq.s32.totalorder %s29, 0
      %p305 = por %p303, %p304
      %p306 = scmp.ne.s32.totalorder %s294, %s295
      %p307 = scmp.eq.s32.totalorder %s30, 1
      %p308 = por %p306, %p307
      %p310 = scmp.ne.s32.totalorder %s295, %s309
      %p311 = scmp.eq.s32.totalorder %s30, 0
      %p312 = por %p310, %p311
      %s313 = ssub.s32 %s31, %s43
      %p314 = scmp.eq.s32.totalorder %s313, 0
      %s316 = sadd.s32 %s315, 1
      %s317 = scalar_select %p314, %s315, %s316
      %p320 = pneg %p314
      %p321 = scmp.eq.s32.totalorder %s24, 1
      %p322 = por %p320, %p321
      %p323 = scmp.ne.s32.totalorder %s315, %s318
      %p324 = scmp.eq.s32.totalorder %s24, 0
      %p325 = por %p323, %p324
      %p326 = scmp.ne.s32.totalorder %s315, %s318
      %p327 = scmp.eq.s32.totalorder %s29, 1
      %p328 = por %p326, %p327
      %p329 = scmp.ne.s32.totalorder %s318, %s319
      %p330 = scmp.eq.s32.totalorder %s29, 0
      %p331 = por %p329, %p330
      %p332 = scmp.ne.s32.totalorder %s318, %s319
      %p333 = scmp.eq.s32.totalorder %s30, 1
      %p334 = por %p332, %p333
      %p336 = scmp.ne.s32.totalorder %s319, %s335
      %p337 = scmp.eq.s32.totalorder %s30, 0
      %p338 = por %p336, %p337
      %s339 = ssub.s32 %s31, %s43
      %p340 = scmp.eq.s32.totalorder %s339, 0
      %s342 = sadd.s32 %s341, 1
      %s343 = scalar_select %p340, %s341, %s342
      %p346 = pneg %p340
      %p347 = scmp.eq.s32.totalorder %s24, 1
      %p348 = por %p346, %p347
      %p349 = scmp.ne.s32.totalorder %s341, %s344
      %p350 = scmp.eq.s32.totalorder %s24, 0
      %p351 = por %p349, %p350
      %p352 = scmp.ne.s32.totalorder %s341, %s344
      %p353 = scmp.eq.s32.totalorder %s29, 1
      %p354 = por %p352, %p353
      %p355 = scmp.ne.s32.totalorder %s344, %s345
      %p356 = scmp.eq.s32.totalorder %s29, 0
      %p357 = por %p355, %p356
      %p358 = scmp.ne.s32.totalorder %s344, %s345
      %p359 = scmp.eq.s32.totalorder %s30, 1
      %p360 = por %p358, %p359
      %p362 = scmp.ne.s32.totalorder %s345, %s361
      %p363 = scmp.eq.s32.totalorder %s30, 0
      %p364 = por %p362, %p363
      %p365 = scmp.le.s32.totalorder 1, %s24
      %p366 = scmp.lt.s32.totalorder %s24, 3
      %p367 = pnand %p365, %p366
      %p368 = pneg %p367
      // Predicated region
      $region9: #{clip_combined_forward.2} parent=5 // pred_check
        _
      $region10: #{clip_combined_forward.2} parent=5 // pred_check_branch
        %370 = sbr.rel (%p367) target = $region12
      $region11: #{clip_combined_forward.2} parent=5 // pred_region
        %s371 = ssub.s32 %s24, 1
        // Predicated region
        $region13: #{clip_combined_forward.2} parent=11 // pred_check
          %p372 = pneg %p57
        $region14: #{clip_combined_forward.2} parent=11 // pred_check_branch
          %374 = sbr.rel (%p372) target = $region16
        $region15: #{clip_combined_forward.2} parent=11 // pred_region
          _
        $region16: #{clip_combined_forward.2} parent=11 // pred_fallthru
          _
        // Predicated region
        $region17: #{clip_combined_forward.2} parent=11 // pred_check
          %p375 = pneg %p132
        $region18: #{clip_combined_forward.2} parent=11 // pred_check_branch
          %377 = sbr.rel (%p375) target = $region20
        $region19: #{clip_combined_forward.2} parent=11 // pred_region
          _
        $region20: #{clip_combined_forward.2} parent=11 // pred_fallthru
          _
        // Predicated region
        $region21: #{clip_combined_forward.2} parent=11 // pred_check
          %p378 = pneg %p158
        $region22: #{clip_combined_forward.2} parent=11 // pred_check_branch
          %380 = sbr.rel (%p378) target = $region24
        $region23: #{clip_combined_forward.2} parent=11 // pred_region
          %p381 = scmp.lt.s32.totalorder %s33, 0
          %s382 = scalar_select %p381, %s33, 0
          %s383 = smul.addr %s382, 8
          %s384 = scalar_lea.vmem %s4, %s383
        $region24: #{clip_combined_forward.2} parent=11 // pred_fallthru
          _
        // Predicated region
        $region25: #{clip_combined_forward.2} parent=11 // pred_check
          %p385 = pneg %p179
        $region26: #{clip_combined_forward.2} parent=11 // pred_check_branch
          %387 = sbr.rel (%p385) target = $region28
        $region27: #{clip_combined_forward.2} parent=11 // pred_region
          _
        $region28: #{clip_combined_forward.2} parent=11 // pred_fallthru
          _
        // Predicated region
        $region29: #{clip_combined_forward.2} parent=11 // pred_check
          %p388 = pneg %p200
        $region30: #{clip_combined_forward.2} parent=11 // pred_check_branch
          %390 = sbr.rel (%p388) target = $region32
        $region31: #{clip_combined_forward.2} parent=11 // pred_region
          _
        $region32: #{clip_combined_forward.2} parent=11 // pred_fallthru
          _
        // Predicated region
        $region33: #{clip_combined_forward.2} parent=11 // pred_check
          %p391 = pneg %p221
        $region34: #{clip_combined_forward.2} parent=11 // pred_check_branch
          %393 = sbr.rel (%p391) target = $region36
        $region35: #{clip_combined_forward.2} parent=11 // pred_region
          _
        $region36: #{clip_combined_forward.2} parent=11 // pred_fallthru
          _
        // Predicated region
        $region37: #{clip_combined_forward.2} parent=11 // pred_check
          %p394 = pneg %p242
        $region38: #{clip_combined_forward.2} parent=11 // pred_check_branch
          %396 = sbr.rel (%p394) target = $region40
        $region39: #{clip_combined_forward.2} parent=11 // pred_region
          _
        $region40: #{clip_combined_forward.2} parent=11 // pred_fallthru
          _
        // Predicated region
        $region41: #{clip_combined_forward.2} parent=11 // pred_check
          %p397 = pneg %p263
        $region42: #{clip_combined_forward.2} parent=11 // pred_check_branch
          %399 = sbr.rel (%p397) target = $region44
        $region43: #{clip_combined_forward.2} parent=11 // pred_region
          _
        $region44: #{clip_combined_forward.2} parent=11 // pred_fallthru
          _
        // Predicated region
        $region45: #{clip_combined_forward.2} parent=11 // pred_check
          %p400 = pneg %p284
        $region46: #{clip_combined_forward.2} parent=11 // pred_check_branch
          %402 = sbr.rel (%p400) target = $region48
        $region47: #{clip_combined_forward.2} parent=11 // pred_region
          _
        $region48: #{clip_combined_forward.2} parent=11 // pred_fallthru
          _
        // Predicated region
        $region49: #{clip_combined_forward.2} parent=11 // pred_check
          %p403 = pneg %p305
        $region50: #{clip_combined_forward.2} parent=11 // pred_check_branch
          %405 = sbr.rel (%p403) target = $region52
        $region51: #{clip_combined_forward.2} parent=11 // pred_region
          _
        $region52: #{clip_combined_forward.2} parent=11 // pred_fallthru
          _
      $region12: #{clip_combined_forward.2} parent=5 // pred_fallthru
        _
      %p406 = scmp.lt.s32.totalorder %s24, 2
      // Predicated region
      $region53: #{clip_combined_forward.2} parent=5 // pred_check
        %p407 = pneg %p406
      $region54: #{clip_combined_forward.2} parent=5 // pred_check_branch
        %409 = sbr.rel (%p407) target = $region56
      $region55: #{clip_combined_forward.2} parent=5 // pred_region
        // Predicated region
        $region57: #{clip_combined_forward.2} parent=55 // pred_check
          %p410 = pneg %p79
        $region58: #{clip_combined_forward.2} parent=55 // pred_check_branch
          %412 = sbr.rel (%p410) target = $region60
        $region59: #{clip_combined_forward.2} parent=55 // pred_region
          %s413 = smul.u32 4, %s32
          %p414 = scmp.lt.s32.totalorder %s31, 0
          %s415 = scalar_select %p414, %s31, 0
          %p416 = scmp.lt.s32.totalorder %s413, 7
          %s417 = scalar_select %p416, %s413, 7
          %s418 = smul.addr %s415, 8
          %s419 = sadd.s32 %s417, %s418
          %s420 = smul.addr %s419, 4
          %s421 = scalar_lea.vmem %s1, %s420
          %s422 = smul.u32 4, %s32
        $region60: #{clip_combined_forward.2} parent=55 // pred_fallthru
          _
        // Predicated region
        $region61: #{clip_combined_forward.2} parent=55 // pred_check
          %p423 = pneg %p105
        $region62: #{clip_combined_forward.2} parent=55 // pred_check_branch
          %425 = sbr.rel (%p423) target = $region64
        $region63: #{clip_combined_forward.2} parent=55 // pred_region
          %s426 = sand.u32 %s95, 1
          %s427 = scalar_lea.sflag [#allocation5], %s426
          %s428 = sand.u32 %s95, 1
          %s429 = smul.addr %s428, 256
          %s430 = scalar_lea.vmem [#allocation4], %s429
          %s431 = smul.u32 64, %s32
          %s433 = ssub.s32 4096, 4096
          %434 = vsyncadd %s427, %s433
          %s435 = smul.addr %s431, 64
          %s436 = scalar_lea.hbm %s2, %s435
          %s437 = sshll.u32 %s430, 4
          %s438 = int_to_ptr.vmem [resolvable:$true] %s437
          %443 = dma.hbm_to_vmem [thread:$0]  %s436, 4096, %s438, %s427, 64, 64, 4
        $region64: #{clip_combined_forward.2} parent=55 // pred_fallthru
          _
      $region56: #{clip_combined_forward.2} parent=5 // pred_fallthru
        _
      %p444 = scmp.le.s32.totalorder 1, %s24
      %p445 = scmp.lt.s32.totalorder %s24, 3
      %p446 = pnand %p444, %p445
      %p447 = pneg %p446
      // Predicated region
      $region65: #{clip_combined_forward.2} parent=5 // pred_check
        _
      $region66: #{clip_combined_forward.2} parent=5 // pred_check_branch
        %449 = sbr.rel (%p446) target = $region68
      $region67: #{clip_combined_forward.2} parent=5 // pred_region
        %s450 = ssub.s32 %s24, 1
        %s451 = sand.u32 %s98, 1
        %s452 = scalar_lea.sflag [#allocation5], %s451
        %s453 = sand.u32 %s98, 1
        %s454 = smul.addr %s453, 256
        %s455 = scalar_lea.vmem [#allocation4], %s454
        // Predicated region
        $region69: #{clip_combined_forward.2} parent=67 // pred_check
          %p456 = pneg %p111
        $region70: #{clip_combined_forward.2} parent=67 // pred_check_branch
          %458 = sbr.rel (%p456) target = $region72
        $region71: #{clip_combined_forward.2} parent=67 // pred_region
          %459 = dma.done %s452, 4096
        $region72: #{clip_combined_forward.2} parent=67 // pred_fallthru
          _
        %p460 = pneg %p57
        %p461 = pneg %p54
        %s462 = smul.u32 4, %s34
        %p463 = scmp.lt.s32.totalorder %s33, 0
        %s464 = scalar_select %p463, %s33, 0
        %p465 = scmp.lt.s32.totalorder %s462, 7
        %s466 = scalar_select %p465, %s462, 7
        %s467 = smul.addr %s464, 8
        %s468 = sadd.s32 %s466, %s467
        %s469 = smul.addr %s468, 4
        %s470 = scalar_lea.vmem %s1, %s469
        %p471 = pneg %p85
        %p472 = pneg %p82
        %s473 = sand.u32 %s98, 1
        %s474 = scalar_lea.sflag [#allocation5], %s473
        %s475 = sand.u32 %s98, 1
        %s476 = smul.addr %s475, 256
        %s477 = scalar_lea.vmem [#allocation4], %s476
        %p478 = pneg %p111
        %p479 = pneg %p108
        %p480 = pneg %p132
        %p481 = pneg %p129
        %p482 = scmp.lt.s32.totalorder %s33, 0
        %s483 = scalar_select %p482, %s33, 0
        %s484 = smul.addr %s483, 8
        %s485 = scalar_lea.vmem %s4, %s484
        %p486 = pneg %p158
        %p487 = pneg %p155
        %p488 = pneg %p179
        %p489 = pneg %p176
        %p490 = pneg %p200
        %p491 = pneg %p197
        %p492 = pneg %p221
        %p493 = pneg %p218
        %p494 = pneg %p242
        %p495 = pneg %p239
        %p496 = pneg %p263
        %p497 = pneg %p260
        %p498 = pneg %p284
        %p499 = pneg %p281
        %p500 = pneg %p305
        %p501 = pneg %p302
        %p502 = pneg %p331
        %p503 = pneg %p328
        %p504 = scmp.lt.s32.totalorder %s33, 0
        %s505 = scalar_select %p504, %s33, 0
        %s506 = smul.addr %s505, 8
        %s507 = scalar_lea.vmem %s12, %s506
        %p508 = pneg %p357
        %p509 = pneg %p354
        %p510 = scmp.lt.s32.totalorder %s33, 0
        %s511 = scalar_select %p510, %s33, 0
        %s512 = smul.addr %s511, 8
        %s513 = scalar_lea.vmem %s13, %s512
        %s514 = smul.u32 4, %s34
        %p515 = scmp.lt.s32.totalorder %s33, 0
        %s516 = scalar_select %p515, %s33, 0
        %p517 = scmp.lt.s32.totalorder %s514, 7
        %s518 = scalar_select %p517, %s514, 7
        %s519 = smul.addr %s516, 8
        %s520 = sadd.s32 %s518, %s519
        %s521 = smul.addr %s520, 4
        %s522 = scalar_lea.vmem %s1, %s521
        %s523 = smul.u32 4, %s34
        %s524 = smul.u32 64, %s34
        %p525 = scmp.lt.s32.totalorder %s33, 0
        %s526 = scalar_select %p525, %s33, 0
        %s527 = smul.addr %s526, 8
        %s528 = scalar_lea.vmem %s4, %s527
        %p529 = scmp.lt.s32.totalorder %s33, 0
        %s530 = scalar_select %p529, %s33, 0
        %s531 = smul.addr %s530, 8
        %s532 = scalar_lea.vmem %s12, %s531
        %p533 = scmp.lt.s32.totalorder %s33, 0
        %s534 = scalar_select %p533, %s33, 0
        %s535 = smul.addr %s534, 8
        %s536 = scalar_lea.vmem %s13, %s535
        %p538 = scmp.eq.s32.totalorder %s34, 0
        // Predicated region
        $region73: #{clip_combined_forward.2} parent=67 // pred_check
          %p539 = pneg %p538
        $region74: #{clip_combined_forward.2} parent=67 // pred_check_branch
          %541 = sbr.rel (%p539) target = $region76
        $region75: #{clip_combined_forward.2} parent=67 // pred_region
          %542 = vst [vmem:[#allocation2] sm:$0xff] 0.0
        $region76: #{clip_combined_forward.2} parent=67 // pred_fallthru
          _
        %v543 = vld [vmem:[#allocation2] sm:$0xff]
        %v544 = vld [vmem:[%s522] sm:$0xff]
        %v545 = vld [vmem:[%s522 + $0x8] sm:$0xff]
        %v546 = vld [vmem:[%s455] sm:$0xf]
        %v547 = vld [vmem:[%s455 + $0x4] sm:$0xf]
        %v548 = vld [vmem:[%s455 + $0x8] sm:$0xf]
        %v549 = vld [vmem:[%s455 + $0xc] sm:$0xf]
        %v550 = vld [vmem:[%s455 + $0x10] sm:$0xf]
        %v551 = vld [vmem:[%s455 + $0x14] sm:$0xf]
        %v552 = vld [vmem:[%s455 + $0x18] sm:$0xf]
        %v553 = vld [vmem:[%s455 + $0x1c] sm:$0xf]
        %v554 = vld [vmem:[%s455 + $0x20] sm:$0xf]
        %v555 = vld [vmem:[%s455 + $0x24] sm:$0xf]
        %v556 = vld [vmem:[%s455 + $0x28] sm:$0xf]
        %v557 = vld [vmem:[%s455 + $0x2c] sm:$0xf]
        %v558 = vld [vmem:[%s455 + $0x30] sm:$0xf]
        %v559 = vld [vmem:[%s455 + $0x34] sm:$0xf]
        %v560 = vld [vmem:[%s455 + $0x38] sm:$0xf]
        %v561 = vld [vmem:[%s455 + $0x3c] sm:$0xf]
        %v562 = vld [vmem:[%s455 + $0x40] sm:$0xf]
        %v563 = vld [vmem:[%s455 + $0x44] sm:$0xf]
        %v564 = vld [vmem:[%s455 + $0x48] sm:$0xf]
        %v565 = vld [vmem:[%s455 + $0x4c] sm:$0xf]
        %v566 = vld [vmem:[%s455 + $0x50] sm:$0xf]
        %v567 = vld [vmem:[%s455 + $0x54] sm:$0xf]
        %v568 = vld [vmem:[%s455 + $0x58] sm:$0xf]
        %v569 = vld [vmem:[%s455 + $0x5c] sm:$0xf]
        %v570 = vld [vmem:[%s455 + $0x60] sm:$0xf]
        %v571 = vld [vmem:[%s455 + $0x64] sm:$0xf]
        %v572 = vld [vmem:[%s455 + $0x68] sm:$0xf]
        %v573 = vld [vmem:[%s455 + $0x6c] sm:$0xf]
        %v574 = vld [vmem:[%s455 + $0x70] sm:$0xf]
        %v575 = vld [vmem:[%s455 + $0x74] sm:$0xf]
        %v576 = vld [vmem:[%s455 + $0x78] sm:$0xf]
        %v577 = vld [vmem:[%s455 + $0x7c] sm:$0xf]
        %v578 = vld [vmem:[%s455 + $0x80] sm:$0xf]
        %v579 = vld [vmem:[%s455 + $0x84] sm:$0xf]
        %v580 = vld [vmem:[%s455 + $0x88] sm:$0xf]
        %v581 = vld [vmem:[%s455 + $0x8c] sm:$0xf]
        %v582 = vld [vmem:[%s455 + $0x90] sm:$0xf]
        %v583 = vld [vmem:[%s455 + $0x94] sm:$0xf]
        %v584 = vld [vmem:[%s455 + $0x98] sm:$0xf]
        %v585 = vld [vmem:[%s455 + $0x9c] sm:$0xf]
        %v586 = vld [vmem:[%s455 + $0xa0] sm:$0xf]
        %v587 = vld [vmem:[%s455 + $0xa4] sm:$0xf]
        %v588 = vld [vmem:[%s455 + $0xa8] sm:$0xf]
        %v589 = vld [vmem:[%s455 + $0xac] sm:$0xf]
        %v590 = vld [vmem:[%s455 + $0xb0] sm:$0xf]
        %v591 = vld [vmem:[%s455 + $0xb4] sm:$0xf]
        %v592 = vld [vmem:[%s455 + $0xb8] sm:$0xf]
        %v593 = vld [vmem:[%s455 + $0xbc] sm:$0xf]
        %v594 = vld [vmem:[%s455 + $0xc0] sm:$0xf]
        %v595 = vld [vmem:[%s455 + $0xc4] sm:$0xf]
        %v596 = vld [vmem:[%s455 + $0xc8] sm:$0xf]
        %v597 = vld [vmem:[%s455 + $0xcc] sm:$0xf]
        %v598 = vld [vmem:[%s455 + $0xd0] sm:$0xf]
        %v599 = vld [vmem:[%s455 + $0xd4] sm:$0xf]
        %v600 = vld [vmem:[%s455 + $0xd8] sm:$0xf]
        %v601 = vld [vmem:[%s455 + $0xdc] sm:$0xf]
        %v602 = vld [vmem:[%s455 + $0xe0] sm:$0xf]
        %v603 = vld [vmem:[%s455 + $0xe4] sm:$0xf]
        %v604 = vld [vmem:[%s455 + $0xe8] sm:$0xf]
        %v605 = vld [vmem:[%s455 + $0xec] sm:$0xf]
        %v606 = vld [vmem:[%s455 + $0xf0] sm:$0xf]
        %v607 = vld [vmem:[%s455 + $0xf4] sm:$0xf]
        %v608 = vld [vmem:[%s455 + $0xf8] sm:$0xf]
        %v609 = vld [vmem:[%s455 + $0xfc] sm:$0xf]
        %v612 = vunpack.c.l.b16 %v544
        %v613 = vunpack.c.h.b16 %v544
        %v614 = vunpack.c.l.b16 %v545
        %v615 = vunpack.c.h.b16 %v545
        %v616 = vpack.c.b16 %v612, %v612
        %v617 = vpack.c.b16 %v613, %v613
        %v618 = vpack.c.b16 %v614, %v614
        %v619 = vpack.c.b16 %v615, %v615
        %v688 = vunpack.c.l.b16 %v546
        %v689 = vunpack.c.l.b16 %v547
        %v690 = vunpack.c.l.b16 %v548
        %v691 = vunpack.c.l.b16 %v549
        %v692 = vunpack.c.l.b16 %v550
        %v693 = vunpack.c.l.b16 %v551
        %v694 = vunpack.c.l.b16 %v552
        %v695 = vunpack.c.l.b16 %v553
        %v696 = vunpack.c.l.b16 %v554
        %v697 = vunpack.c.l.b16 %v555
        %v698 = vunpack.c.l.b16 %v556
        %v699 = vunpack.c.l.b16 %v557
        %v700 = vunpack.c.l.b16 %v558
        %v701 = vunpack.c.l.b16 %v559
        %v702 = vunpack.c.l.b16 %v560
        %v703 = vunpack.c.l.b16 %v561
        %v704 = vunpack.c.l.b16 %v562
        %v705 = vunpack.c.l.b16 %v563
        %v706 = vunpack.c.l.b16 %v564
        %v707 = vunpack.c.l.b16 %v565
        %v708 = vunpack.c.l.b16 %v566
        %v709 = vunpack.c.l.b16 %v567
        %v710 = vunpack.c.l.b16 %v568
        %v711 = vunpack.c.l.b16 %v569
        %v712 = vunpack.c.l.b16 %v570
        %v713 = vunpack.c.l.b16 %v571
        %v714 = vunpack.c.l.b16 %v572
        %v715 = vunpack.c.l.b16 %v573
        %v716 = vunpack.c.l.b16 %v574
        %v717 = vunpack.c.l.b16 %v575
        %v718 = vunpack.c.l.b16 %v576
        %v719 = vunpack.c.l.b16 %v577
        %v720 = vunpack.c.l.b16 %v578
        %v721 = vunpack.c.l.b16 %v579
        %v722 = vunpack.c.l.b16 %v580
        %v723 = vunpack.c.l.b16 %v581
        %v724 = vunpack.c.l.b16 %v582
        %v725 = vunpack.c.l.b16 %v583
        %v726 = vunpack.c.l.b16 %v584
        %v727 = vunpack.c.l.b16 %v585
        %v728 = vunpack.c.l.b16 %v586
        %v729 = vunpack.c.l.b16 %v587
        %v730 = vunpack.c.l.b16 %v588
        %v731 = vunpack.c.l.b16 %v589
        %v732 = vunpack.c.l.b16 %v590
        %v733 = vunpack.c.l.b16 %v591
        %v734 = vunpack.c.l.b16 %v592
        %v735 = vunpack.c.l.b16 %v593
        %v736 = vunpack.c.l.b16 %v594
        %v737 = vunpack.c.l.b16 %v595
        %v738 = vunpack.c.l.b16 %v596
        %v739 = vunpack.c.l.b16 %v597
        %v740 = vunpack.c.l.b16 %v598
        %v741 = vunpack.c.l.b16 %v599
        %v742 = vunpack.c.l.b16 %v600
        %v743 = vunpack.c.l.b16 %v601
        %v744 = vunpack.c.l.b16 %v602
        %v745 = vunpack.c.l.b16 %v603
        %v746 = vunpack.c.l.b16 %v604
        %v747 = vunpack.c.l.b16 %v605
        %v748 = vunpack.c.l.b16 %v606
        %v749 = vunpack.c.l.b16 %v607
        %v750 = vunpack.c.l.b16 %v608
        %v751 = vunpack.c.l.b16 %v609
        %v752 = vpack.c.b16 %v689, %v688
        %v753 = vpack.c.b16 %v691, %v690
        %v754 = vpack.c.b16 %v693, %v692
        %v755 = vpack.c.b16 %v695, %v694
        %v756 = vpack.c.b16 %v697, %v696
        %v757 = vpack.c.b16 %v699, %v698
        %v758 = vpack.c.b16 %v701, %v700
        %v759 = vpack.c.b16 %v703, %v702
        %v760 = vpack.c.b16 %v705, %v704
        %v761 = vpack.c.b16 %v707, %v706
        %v762 = vpack.c.b16 %v709, %v708
        %v763 = vpack.c.b16 %v711, %v710
        %v764 = vpack.c.b16 %v713, %v712
        %v765 = vpack.c.b16 %v715, %v714
        %v766 = vpack.c.b16 %v717, %v716
        %v767 = vpack.c.b16 %v719, %v718
        %v768 = vpack.c.b16 %v721, %v720
        %v769 = vpack.c.b16 %v723, %v722
        %v770 = vpack.c.b16 %v725, %v724
        %v771 = vpack.c.b16 %v727, %v726
        %v772 = vpack.c.b16 %v729, %v728
        %v773 = vpack.c.b16 %v731, %v730
        %v774 = vpack.c.b16 %v733, %v732
        %v775 = vpack.c.b16 %v735, %v734
        %v776 = vpack.c.b16 %v737, %v736
        %v777 = vpack.c.b16 %v739, %v738
        %v778 = vpack.c.b16 %v741, %v740
        %v779 = vpack.c.b16 %v743, %v742
        %v780 = vpack.c.b16 %v745, %v744
        %v781 = vpack.c.b16 %v747, %v746
        %v782 = vpack.c.b16 %v749, %v748
        %v783 = vpack.c.b16 %v751, %v750
        %816 = vmatprep.subr.bf16.mxu0 0
        %817 = vmatpush1.bf16.msra.mxu0 %v752
        %818 = vmatprep.subr.bf16.mxu0 0
        %819 = vmatpush1.bf16.msra.mxu0 %v753
        %820 = vmatprep.subr.bf16.mxu0 0
        %821 = vmatpush1.bf16.msra.mxu0 %v754
        %822 = vmatprep.subr.bf16.mxu0 0
        %823 = vmatpush1.bf16.msra.mxu0 %v755
        %824 = vmatprep.subr.bf16.mxu0 0
        %825 = vmatpush1.bf16.msra.mxu0 %v756
        %826 = vmatprep.subr.bf16.mxu0 0
        %827 = vmatpush1.bf16.msra.mxu0 %v757
        %828 = vmatprep.subr.bf16.mxu0 0
        %829 = vmatpush1.bf16.msra.mxu0 %v758
        %830 = vmatprep.subr.bf16.mxu0 0
        %831 = vmatpush1.bf16.msra.mxu0 %v759
        %832 = vmatprep.subr.bf16.mxu0 0
        %833 = vmatpush1.bf16.msra.mxu0 %v760
        %834 = vmatprep.subr.bf16.mxu0 0
        %835 = vmatpush1.bf16.msra.mxu0 %v761
        %836 = vmatprep.subr.bf16.mxu0 0
        %837 = vmatpush1.bf16.msra.mxu0 %v762
        %838 = vmatprep.subr.bf16.mxu0 0
        %839 = vmatpush1.bf16.msra.mxu0 %v763
        %840 = vmatprep.subr.bf16.mxu0 0
        %841 = vmatpush1.bf16.msra.mxu0 %v764
        %842 = vmatprep.subr.bf16.mxu0 0
        %843 = vmatpush1.bf16.msra.mxu0 %v765
        %844 = vmatprep.subr.bf16.mxu0 0
        %845 = vmatpush1.bf16.msra.mxu0 %v766
        %846 = vmatprep.subr.bf16.mxu0 0
        %847 = vmatpush1.bf16.msra.mxu0 %v767
        %848 = vmatprep.mubr.bf16.mxu0 %v617
        %849 = vmatmul.mubr.bf16.gmra.mrb[0].mxu0 %v616
        %v850 = vpop.f32.mrb[0].mxu0
        %v851 = vadd.f32 0.0, %v850
        %v852 = vpop.f32.mrb[0].mxu0
        %v853 = vpop.f32.mrb[0].mxu0
        %v854 = vpop.f32.mrb[0].mxu0
        %855 = vdwg.mxu0
        %856 = vmatprep.subr.bf16.mxu0 0
        %857 = vmatpush1.bf16.msra.mxu0 %v768
        %858 = vmatprep.subr.bf16.mxu0 0
        %859 = vmatpush1.bf16.msra.mxu0 %v769
        %860 = vmatprep.subr.bf16.mxu0 0
        %861 = vmatpush1.bf16.msra.mxu0 %v770
        %862 = vmatprep.subr.bf16.mxu0 0
        %863 = vmatpush1.bf16.msra.mxu0 %v771
        %864 = vmatprep.subr.bf16.mxu0 0
        %865 = vmatpush1.bf16.msra.mxu0 %v772
        %866 = vmatprep.subr.bf16.mxu0 0
        %867 = vmatpush1.bf16.msra.mxu0 %v773
        %868 = vmatprep.subr.bf16.mxu0 0
        %869 = vmatpush1.bf16.msra.mxu0 %v774
        %870 = vmatprep.subr.bf16.mxu0 0
        %871 = vmatpush1.bf16.msra.mxu0 %v775
        %872 = vmatprep.subr.bf16.mxu0 0
        %873 = vmatpush1.bf16.msra.mxu0 %v776
        %874 = vmatprep.subr.bf16.mxu0 0
        %875 = vmatpush1.bf16.msra.mxu0 %v777
        %876 = vmatprep.subr.bf16.mxu0 0
        %877 = vmatpush1.bf16.msra.mxu0 %v778
        %878 = vmatprep.subr.bf16.mxu0 0
        %879 = vmatpush1.bf16.msra.mxu0 %v779
        %880 = vmatprep.subr.bf16.mxu0 0
        %881 = vmatpush1.bf16.msra.mxu0 %v780
        %882 = vmatprep.subr.bf16.mxu0 0
        %883 = vmatpush1.bf16.msra.mxu0 %v781
        %884 = vmatprep.subr.bf16.mxu0 0
        %885 = vmatpush1.bf16.msra.mxu0 %v782
        %886 = vmatprep.subr.bf16.mxu0 0
        %887 = vmatpush1.bf16.msra.mxu0 %v783
        %888 = vmatprep.mubr.bf16.mxu0 %v619
        %889 = vmatmul.mubr.bf16.gmra.mrb[0].mxu0 %v618
        %v890 = vpop.f32.mrb[0].mxu0
        %v891 = vadd.f32 %v851, %v890
        %v892 = vpop.f32.mrb[0].mxu0
        %v893 = vpop.f32.mrb[0].mxu0
        %v894 = vpop.f32.mrb[0].mxu0
        %895 = vdwg.mxu0
        %v896 = vadd.f32 %v543, %v891
        %897 = vst [vmem:[#allocation2] sm:$0xff] %v896
        %p898 = scmp.eq.s32.totalorder %s34, 1
        // Predicated region
        $region77: #{clip_combined_forward.2} parent=67 // pred_check
          %p899 = pneg %p898
        $region78: #{clip_combined_forward.2} parent=67 // pred_check_branch
          %901 = sbr.rel (%p899) target = $region80
        $region79: #{clip_combined_forward.2} parent=67 // pred_region
          %s902 = sld [smem:[#allocation3]]
          %v903 = vld [vmem:[#allocation2] sm:$0xff]
          %v904 = vld [vmem:[%s3] sm:$0x1]
          %v906 = vlaneseq
          %v907 = vshrl.u32 %v906, 7
          %v908 = vsub.s32 0, %v907
          %v909 = vrot.slane %v904, %v908
          %v911 = vadd.f32 %v903, %v909
          %v912 = vpack.c.bf16 %v911, %v911
          %v913 = vld [vmem:[%s8] sm:$0xf]
          %v914 = vld [vmem:[%s8 + $0x4] sm:$0xf]
          %v915 = vld [vmem:[%s8 + $0x8] sm:$0xf]
          %v916 = vld [vmem:[%s8 + $0xc] sm:$0xf]
          %v917 = vld [vmem:[%s8 + $0x10] sm:$0xf]
          %v918 = vld [vmem:[%s8 + $0x14] sm:$0xf]
          %v919 = vld [vmem:[%s8 + $0x18] sm:$0xf]
          %v920 = vld [vmem:[%s8 + $0x1c] sm:$0xf]
          %v921 = vld [vmem:[%s8 + $0x20] sm:$0xf]
          %v922 = vld [vmem:[%s8 + $0x24] sm:$0xf]
          %v923 = vld [vmem:[%s8 + $0x28] sm:$0xf]
          %v924 = vld [vmem:[%s8 + $0x2c] sm:$0xf]
          %v925 = vld [vmem:[%s8 + $0x30] sm:$0xf]
          %v926 = vld [vmem:[%s8 + $0x34] sm:$0xf]
          %v927 = vld [vmem:[%s8 + $0x38] sm:$0xf]
          %v928 = vld [vmem:[%s8 + $0x3c] sm:$0xf]
          %v929 = vld [vmem:[%s9] sm:$0x1]
          %v931 = vlaneseq
          %v932 = vshrl.u32 %v931, 7
          %v933 = vsub.s32 0, %v932
          %v934 = vrot.slane %v929, %v933
          %v952 = vunpack.c.l.b16 %v913
          %v953 = vunpack.c.l.b16 %v914
          %v954 = vunpack.c.l.b16 %v915
          %v955 = vunpack.c.l.b16 %v916
          %v956 = vunpack.c.l.b16 %v917
          %v957 = vunpack.c.l.b16 %v918
          %v958 = vunpack.c.l.b16 %v919
          %v959 = vunpack.c.l.b16 %v920
          %v960 = vunpack.c.l.b16 %v921
          %v961 = vunpack.c.l.b16 %v922
          %v962 = vunpack.c.l.b16 %v923
          %v963 = vunpack.c.l.b16 %v924
          %v964 = vunpack.c.l.b16 %v925
          %v965 = vunpack.c.l.b16 %v926
          %v966 = vunpack.c.l.b16 %v927
          %v967 = vunpack.c.l.b16 %v928
          %v968 = vpack.c.b16 %v953, %v952
          %v969 = vpack.c.b16 %v955, %v954
          %v970 = vpack.c.b16 %v957, %v956
          %v971 = vpack.c.b16 %v959, %v958
          %v972 = vpack.c.b16 %v961, %v960
          %v973 = vpack.c.b16 %v963, %v962
          %v974 = vpack.c.b16 %v965, %v964
          %v975 = vpack.c.b16 %v967, %v966
          %984 = vmatprep.subr.bf16.mxu0 0
          %985 = vmatpush1.bf16.msra.mxu0 %v968
          %986 = vmatprep.subr.bf16.mxu0 0
          %987 = vmatpush1.bf16.msra.mxu0 %v969
          %988 = vmatprep.subr.bf16.mxu0 0
          %989 = vmatpush1.bf16.msra.mxu0 %v970
          %990 = vmatprep.subr.bf16.mxu0 0
          %991 = vmatpush1.bf16.msra.mxu0 %v971
          %992 = vmatprep.subr.bf16.mxu0 0
          %993 = vmatpush1.bf16.msra.mxu0 %v972
          %994 = vmatprep.subr.bf16.mxu0 0
          %995 = vmatpush1.bf16.msra.mxu0 %v973
          %996 = vmatprep.subr.bf16.mxu0 0
          %997 = vmatpush1.bf16.msra.mxu0 %v974
          %998 = vmatprep.subr.bf16.mxu0 0
          %999 = vmatpush1.bf16.msra.mxu0 %v975
          %1000 = vmatprep.subr.bf16.mxu0 0
          %1001 = vmatpush1.bf16.msra.mxu0 0
          %1002 = vmatprep.subr.bf16.mxu0 0
          %1003 = vmatpush1.bf16.msra.mxu0 0
          %1004 = vmatprep.subr.bf16.mxu0 0
          %1005 = vmatpush1.bf16.msra.mxu0 0
          %1006 = vmatprep.subr.bf16.mxu0 0
          %1007 = vmatpush1.bf16.msra.mxu0 0
          %1008 = vmatprep.subr.bf16.mxu0 0
          %1009 = vmatpush1.bf16.msra.mxu0 0
          %1010 = vmatprep.subr.bf16.mxu0 0
          %1011 = vmatpush1.bf16.msra.mxu0 0
          %1012 = vmatprep.subr.bf16.mxu0 0
          %1013 = vmatpush1.bf16.msra.mxu0 0
          %1014 = vmatprep.subr.bf16.mxu0 0
          %1015 = vmatpush1.bf16.msra.mxu0 0
          %1016 = vmatprep.mubr.bf16.mxu0 0
          %1017 = vmatmul.mubr.bf16.gmra.mrb[0].mxu0 %v912
          %v1018 = vpop.f32.mrb[0].mxu0
          %v1019 = vadd.f32 %v934, %v1018
          %v1020 = vpop.f32.mrb[0].mxu0
          %v1021 = vpop.f32.mrb[0].mxu0
          %v1022 = vpop.f32.mrb[0].mxu0
          %1023 = vdwg.mxu0
          %v1024 = vmul.f32 %v1019, %v1019
          %1025 = vadd.xlane.f32.xlu0 %v1024
          %v1026 = vpop.xlane.xlu0 %1025
          %vm1027 = vcmp.gt.f32.partialorder %v1026, 0.0
          %v1028 = vrsqrt.pop %v1026
          %v1029 = vstv %s902
          %v1030 = vmul.f32 %v1029, %v1028
          %v1031 = vsel %vm1027, %v1030, 0.0
          %v1032 = vmul.f32 %v1019, %v1031
          %1033 = vst [vmem:[%s532] sm:$0xff] %v1032
          %v1034 = vld [vmem:[%s528] sm:$0xff]
          %v1035 = vlaneseq
          %v1036 = vand.u32 %v1035, 127
          %1037 = vset.pattern.permute.xlu0 0
          %1038 = vperm.xlu0 %1037, %v1034
          %v1039 = vpop.permute.xlu0 %1038
          %vm1040 = vcmp.eq.s32.totalorder %v1039, %v1036
          %v1041 = vsel %vm1040, 1, 0
          %1042 = vset.pattern.permute.xlu0 1
          %1043 = vperm.xlu0 %1042, %v1034
          %v1044 = vpop.permute.xlu0 %1043
          %vm1045 = vcmp.eq.s32.totalorder %v1044, %v1036
          %v1046 = vsel %vm1045, 1, 0
          %v1047 = vadd.s32 %v1041, %v1046
          %1048 = vset.pattern.permute.xlu0 2
          %1049 = vperm.xlu0 %1048, %v1034
          %v1050 = vpop.permute.xlu0 %1049
          %vm1051 = vcmp.eq.s32.totalorder %v1050, %v1036
          %v1052 = vsel %vm1051, 1, 0
          %v1053 = vadd.s32 %v1047, %v1052
          %1054 = vset.pattern.permute.xlu0 3
          %1055 = vperm.xlu0 %1054, %v1034
          %v1056 = vpop.permute.xlu0 %1055
          %vm1057 = vcmp.eq.s32.totalorder %v1056, %v1036
          %v1058 = vsel %vm1057, 1, 0
          %v1059 = vadd.s32 %v1053, %v1058
          %1060 = vset.pattern.permute.xlu0 4
          %1061 = vperm.xlu0 %1060, %v1034
          %v1062 = vpop.permute.xlu0 %1061
          %vm1063 = vcmp.eq.s32.totalorder %v1062, %v1036
          %v1064 = vsel %vm1063, 1, 0
          %v1065 = vadd.s32 %v1059, %v1064
          %1066 = vset.pattern.permute.xlu0 5
          %1067 = vperm.xlu0 %1066, %v1034
          %v1068 = vpop.permute.xlu0 %1067
          %vm1069 = vcmp.eq.s32.totalorder %v1068, %v1036
          %v1070 = vsel %vm1069, 1, 0
          %v1071 = vadd.s32 %v1065, %v1070
          %1072 = vset.pattern.permute.xlu0 6
          %1073 = vperm.xlu0 %1072, %v1034
          %v1074 = vpop.permute.xlu0 %1073
          %vm1075 = vcmp.eq.s32.totalorder %v1074, %v1036
          %v1076 = vsel %vm1075, 1, 0
          %v1077 = vadd.s32 %v1071, %v1076
          %1078 = vset.pattern.permute.xlu0 7
          %1079 = vperm.xlu0 %1078, %v1034
          %v1080 = vpop.permute.xlu0 %1079
          %vm1081 = vcmp.eq.s32.totalorder %v1080, %v1036
          %v1082 = vsel %vm1081, 1, 0
          %v1083 = vadd.s32 %v1077, %v1082
          %v1084 = vcvt.s32.f32 %v1083
          %v1085 = vpack.c.bf16 %v1084, %v1084
          %v1086 = vld [vmem:[%s5] sm:$0xf]
          %v1087 = vld [vmem:[%s5 + $0x4] sm:$0xf]
          %v1088 = vld [vmem:[%s5 + $0x8] sm:$0xf]
          %v1089 = vld [vmem:[%s5 + $0xc] sm:$0xf]
          %v1094 = vunpack.c.l.b16 %v1086
          %v1095 = vunpack.c.l.b16 %v1087
          %v1096 = vunpack.c.l.b16 %v1088
          %v1097 = vunpack.c.l.b16 %v1089
          %v1098 = vpack.c.b16 %v1095, %v1094
          %v1099 = vpack.c.b16 %v1097, %v1096
          %vm1102 = vcmask 261120
          %v1104 = vsel %vm1102, %v1085, 0
          %1106 = vmatprep.subr.bf16.mxu0 0
          %1107 = vmatpush1.bf16.msra.mxu0 %v1098
          %1108 = vmatprep.subr.bf16.mxu0 0
          %1109 = vmatpush1.bf16.msra.mxu0 %v1099
          %1110 = vmatprep.subr.bf16.mxu0 0
          %1111 = vmatpush1.bf16.msra.mxu0 0
          %1112 = vmatprep.subr.bf16.mxu0 0
          %1113 = vmatpush1.bf16.msra.mxu0 0
          %1114 = vmatprep.subr.bf16.mxu0 0
          %1115 = vmatpush1.bf16.msra.mxu0 0
          %1116 = vmatprep.subr.bf16.mxu0 0
          %1117 = vmatpush1.bf16.msra.mxu0 0
          %1118 = vmatprep.subr.bf16.mxu0 0
          %1119 = vmatpush1.bf16.msra.mxu0 0
          %1120 = vmatprep.subr.bf16.mxu0 0
          %1121 = vmatpush1.bf16.msra.mxu0 0
          %1122 = vmatprep.subr.bf16.mxu0 0
          %1123 = vmatpush1.bf16.msra.mxu0 0
          %1124 = vmatprep.subr.bf16.mxu0 0
          %1125 = vmatpush1.bf16.msra.mxu0 0
          %1126 = vmatprep.subr.bf16.mxu0 0
          %1127 = vmatpush1.bf16.msra.mxu0 0
          %1128 = vmatprep.subr.bf16.mxu0 0
          %1129 = vmatpush1.bf16.msra.mxu0 0
          %1130 = vmatprep.subr.bf16.mxu0 0
          %1131 = vmatpush1.bf16.msra.mxu0 0
          %1132 = vmatprep.subr.bf16.mxu0 0
          %1133 = vmatpush1.bf16.msra.mxu0 0
          %1134 = vmatprep.subr.bf16.mxu0 0
          %1135 = vmatpush1.bf16.msra.mxu0 0
          %1136 = vmatprep.subr.bf16.mxu0 0
          %1137 = vmatpush1.bf16.msra.mxu0 0
          %1138 = vmatprep.mubr.bf16.mxu0 0
          %1139 = vmatmul.mubr.bf16.gmra.mrb[0].mxu0 %v1104
          %v1140 = vpop.f32.mrb[0].mxu0
          %v1141 = vadd.f32 0.0, %v1140
          %v1142 = vpop.f32.mrb[0].mxu0
          %v1143 = vpop.f32.mrb[0].mxu0
          %v1144 = vpop.f32.mrb[0].mxu0
          %1145 = vdwg.mxu0
          %v1146 = vmul.f32 %v1141, 0.125
          %v1147 = vpack.c.bf16 %v1146, %v1146
          %v1148 = vld [vmem:[%s6] sm:$0xf]
          %v1149 = vld [vmem:[%s6 + $0x4] sm:$0xf]
          %v1150 = vld [vmem:[%s6 + $0x8] sm:$0xf]
          %v1151 = vld [vmem:[%s6 + $0xc] sm:$0xf]
          %v1152 = vld [vmem:[%s6 + $0x10] sm:$0xf]
          %v1153 = vld [vmem:[%s6 + $0x14] sm:$0xf]
          %v1154 = vld [vmem:[%s6 + $0x18] sm:$0xf]
          %v1155 = vld [vmem:[%s6 + $0x1c] sm:$0xf]
          %v1156 = vld [vmem:[%s6 + $0x20] sm:$0xf]
          %v1157 = vld [vmem:[%s6 + $0x24] sm:$0xf]
          %v1158 = vld [vmem:[%s6 + $0x28] sm:$0xf]
          %v1159 = vld [vmem:[%s6 + $0x2c] sm:$0xf]
          %v1160 = vld [vmem:[%s6 + $0x30] sm:$0xf]
          %v1161 = vld [vmem:[%s6 + $0x34] sm:$0xf]
          %v1162 = vld [vmem:[%s6 + $0x38] sm:$0xf]
          %v1163 = vld [vmem:[%s6 + $0x3c] sm:$0xf]
          %v1164 = vld [vmem:[%s7] sm:$0x1]
          %v1166 = vlaneseq
          %v1167 = vshrl.u32 %v1166, 7
          %v1168 = vsub.s32 0, %v1167
          %v1169 = vrot.slane %v1164, %v1168
          %v1187 = vunpack.c.l.b16 %v1148
          %v1188 = vunpack.c.l.b16 %v1149
          %v1189 = vunpack.c.l.b16 %v1150
          %v1190 = vunpack.c.l.b16 %v1151
          %v1191 = vunpack.c.l.b16 %v1152
          %v1192 = vunpack.c.l.b16 %v1153
          %v1193 = vunpack.c.l.b16 %v1154
          %v1194 = vunpack.c.l.b16 %v1155
          %v1195 = vunpack.c.l.b16 %v1156
          %v1196 = vunpack.c.l.b16 %v1157
          %v1197 = vunpack.c.l.b16 %v1158
          %v1198 = vunpack.c.l.b16 %v1159
          %v1199 = vunpack.c.l.b16 %v1160
          %v1200 = vunpack.c.l.b16 %v1161
          %v1201 = vunpack.c.l.b16 %v1162
          %v1202 = vunpack.c.l.b16 %v1163
          %v1203 = vpack.c.b16 %v1188, %v1187
          %v1204 = vpack.c.b16 %v1190, %v1189
          %v1205 = vpack.c.b16 %v1192, %v1191
          %v1206 = vpack.c.b16 %v1194, %v1193
          %v1207 = vpack.c.b16 %v1196, %v1195
          %v1208 = vpack.c.b16 %v1198, %v1197
          %v1209 = vpack.c.b16 %v1200, %v1199
          %v1210 = vpack.c.b16 %v1202, %v1201
          %1219 = vmatprep.subr.bf16.mxu0 0
          %1220 = vmatpush1.bf16.msra.mxu0 %v1203
          %1221 = vmatprep.subr.bf16.mxu0 0
          %1222 = vmatpush1.bf16.msra.mxu0 %v1204
          %1223 = vmatprep.subr.bf16.mxu0 0
          %1224 = vmatpush1.bf16.msra.mxu0 %v1205
          %1225 = vmatprep.subr.bf16.mxu0 0
          %1226 = vmatpush1.bf16.msra.mxu0 %v1206
          %1227 = vmatprep.subr.bf16.mxu0 0
          %1228 = vmatpush1.bf16.msra.mxu0 %v1207
          %1229 = vmatprep.subr.bf16.mxu0 0
          %1230 = vmatpush1.bf16.msra.mxu0 %v1208
          %1231 = vmatprep.subr.bf16.mxu0 0
          %1232 = vmatpush1.bf16.msra.mxu0 %v1209
          %1233 = vmatprep.subr.bf16.mxu0 0
          %1234 = vmatpush1.bf16.msra.mxu0 %v1210
          %1235 = vmatprep.subr.bf16.mxu0 0
          %1236 = vmatpush1.bf16.msra.mxu0 0
          %1237 = vmatprep.subr.bf16.mxu0 0
          %1238 = vmatpush1.bf16.msra.mxu0 0
          %1239 = vmatprep.subr.bf16.mxu0 0
          %1240 = vmatpush1.bf16.msra.mxu0 0
          %1241 = vmatprep.subr.bf16.mxu0 0
          %1242 = vmatpush1.bf16.msra.mxu0 0
          %1243 = vmatprep.subr.bf16.mxu0 0
          %1244 = vmatpush1.bf16.msra.mxu0 0
          %1245 = vmatprep.subr.bf16.mxu0 0
          %1246 = vmatpush1.bf16.msra.mxu0 0
          %1247 = vmatprep.subr.bf16.mxu0 0
          %1248 = vmatpush1.bf16.msra.mxu0 0
          %1249 = vmatprep.subr.bf16.mxu0 0
          %1250 = vmatpush1.bf16.msra.mxu0 0
          %1251 = vmatprep.mubr.bf16.mxu0 0
          %1252 = vmatmul.mubr.bf16.gmra.mrb[0].mxu0 %v1147
          %v1253 = vpop.f32.mrb[0].mxu0
          %v1254 = vadd.f32 %v1169, %v1253
          %v1255 = vpop.f32.mrb[0].mxu0
          %v1256 = vpop.f32.mrb[0].mxu0
          %v1257 = vpop.f32.mrb[0].mxu0
          %1258 = vdwg.mxu0
          %v1259 = vpack.c.bf16 %v1254, %v1254
          %v1260 = vld [vmem:[%s10] sm:$0xf]
          %v1261 = vld [vmem:[%s10 + $0x4] sm:$0xf]
          %v1262 = vld [vmem:[%s10 + $0x8] sm:$0xf]
          %v1263 = vld [vmem:[%s10 + $0xc] sm:$0xf]
          %v1264 = vld [vmem:[%s10 + $0x10] sm:$0xf]
          %v1265 = vld [vmem:[%s10 + $0x14] sm:$0xf]
          %v1266 = vld [vmem:[%s10 + $0x18] sm:$0xf]
          %v1267 = vld [vmem:[%s10 + $0x1c] sm:$0xf]
          %v1268 = vld [vmem:[%s10 + $0x20] sm:$0xf]
          %v1269 = vld [vmem:[%s10 + $0x24] sm:$0xf]
          %v1270 = vld [vmem:[%s10 + $0x28] sm:$0xf]
          %v1271 = vld [vmem:[%s10 + $0x2c] sm:$0xf]
          %v1272 = vld [vmem:[%s10 + $0x30] sm:$0xf]
          %v1273 = vld [vmem:[%s10 + $0x34] sm:$0xf]
          %v1274 = vld [vmem:[%s10 + $0x38] sm:$0xf]
          %v1275 = vld [vmem:[%s10 + $0x3c] sm:$0xf]
          %v1276 = vld [vmem:[%s11] sm:$0x1]
          %v1278 = vlaneseq
          %v1279 = vshrl.u32 %v1278, 7
          %v1280 = vsub.s32 0, %v1279
          %v1281 = vrot.slane %v1276, %v1280
          %v1299 = vunpack.c.l.b16 %v1260
          %v1300 = vunpack.c.l.b16 %v1261
          %v1301 = vunpack.c.l.b16 %v1262
          %v1302 = vunpack.c.l.b16 %v1263
          %v1303 = vunpack.c.l.b16 %v1264
          %v1304 = vunpack.c.l.b16 %v1265
          %v1305 = vunpack.c.l.b16 %v1266
          %v1306 = vunpack.c.l.b16 %v1267
          %v1307 = vunpack.c.l.b16 %v1268
          %v1308 = vunpack.c.l.b16 %v1269
          %v1309 = vunpack.c.l.b16 %v1270
          %v1310 = vunpack.c.l.b16 %v1271
          %v1311 = vunpack.c.l.b16 %v1272
          %v1312 = vunpack.c.l.b16 %v1273
          %v1313 = vunpack.c.l.b16 %v1274
          %v1314 = vunpack.c.l.b16 %v1275
          %v1315 = vpack.c.b16 %v1300, %v1299
          %v1316 = vpack.c.b16 %v1302, %v1301
          %v1317 = vpack.c.b16 %v1304, %v1303
          %v1318 = vpack.c.b16 %v1306, %v1305
          %v1319 = vpack.c.b16 %v1308, %v1307
          %v1320 = vpack.c.b16 %v1310, %v1309
          %v1321 = vpack.c.b16 %v1312, %v1311
          %v1322 = vpack.c.b16 %v1314, %v1313
          %1331 = vmatprep.subr.bf16.mxu0 0
          %1332 = vmatpush1.bf16.msra.mxu0 %v1315
          %1333 = vmatprep.subr.bf16.mxu0 0
          %1334 = vmatpush1.bf16.msra.mxu0 %v1316
          %1335 = vmatprep.subr.bf16.mxu0 0
          %1336 = vmatpush1.bf16.msra.mxu0 %v1317
          %1337 = vmatprep.subr.bf16.mxu0 0
          %1338 = vmatpush1.bf16.msra.mxu0 %v1318
          %1339 = vmatprep.subr.bf16.mxu0 0
          %1340 = vmatpush1.bf16.msra.mxu0 %v1319
          %1341 = vmatprep.subr.bf16.mxu0 0
          %1342 = vmatpush1.bf16.msra.mxu0 %v1320
          %1343 = vmatprep.subr.bf16.mxu0 0
          %1344 = vmatpush1.bf16.msra.mxu0 %v1321
          %1345 = vmatprep.subr.bf16.mxu0 0
          %1346 = vmatpush1.bf16.msra.mxu0 %v1322
          %1347 = vmatprep.subr.bf16.mxu0 0
          %1348 = vmatpush1.bf16.msra.mxu0 0
          %1349 = vmatprep.subr.bf16.mxu0 0
          %1350 = vmatpush1.bf16.msra.mxu0 0
          %1351 = vmatprep.subr.bf16.mxu0 0
          %1352 = vmatpush1.bf16.msra.mxu0 0
          %1353 = vmatprep.subr.bf16.mxu0 0
          %1354 = vmatpush1.bf16.msra.mxu0 0
          %1355 = vmatprep.subr.bf16.mxu0 0
          %1356 = vmatpush1.bf16.msra.mxu0 0
          %1357 = vmatprep.subr.bf16.mxu0 0
          %1358 = vmatpush1.bf16.msra.mxu0 0
          %1359 = vmatprep.subr.bf16.mxu0 0
          %1360 = vmatpush1.bf16.msra.mxu0 0
          %1361 = vmatprep.subr.bf16.mxu0 0
          %1362 = vmatpush1.bf16.msra.mxu0 0
          %1363 = vmatprep.mubr.bf16.mxu0 0
          %1364 = vmatmul.mubr.bf16.gmra.mrb[0].mxu0 %v1259
          %v1365 = vpop.f32.mrb[0].mxu0
          %v1366 = vadd.f32 %v1281, %v1365
          %v1367 = vpop.f32.mrb[0].mxu0
          %v1368 = vpop.f32.mrb[0].mxu0
          %v1369 = vpop.f32.mrb[0].mxu0
          %1370 = vdwg.mxu0
          %v1371 = vmul.f32 %v1366, %v1366
          %1372 = vadd.xlane.f32.xlu0 %v1371
          %v1373 = vpop.xlane.xlu0 %1372
          %vm1374 = vcmp.gt.f32.partialorder %v1373, 0.0
          %v1375 = vrsqrt.pop %v1373
          %v1376 = vsel %vm1374, %v1375, 0.0
          %v1377 = vmul.f32 %v1366, %v1376
          %1378 = vst [vmem:[%s536] sm:$0xff] %v1377
        $region80: #{clip_combined_forward.2} parent=67 // pred_fallthru
          _
        %p1379 = scmp.lt.s32.totalorder %s33, 0
        %s1380 = scalar_select %p1379, %s33, 0
        %s1381 = smul.addr %s1380, 8
        %s1382 = scalar_lea.vmem %s12, %s1381
        %p1383 = scmp.lt.s32.totalorder %s33, 0
        %s1384 = scalar_select %p1383, %s33, 0
        %s1385 = smul.addr %s1384, 8
        %s1386 = scalar_lea.vmem %s13, %s1385
        // Predicated region
        $region81: #{clip_combined_forward.2} parent=67 // pred_check
          %p1387 = pneg %p328
        $region82: #{clip_combined_forward.2} parent=67 // pred_check_branch
          %1389 = sbr.rel (%p1387) target = $region84
        $region83: #{clip_combined_forward.2} parent=67 // pred_region
          _
        $region84: #{clip_combined_forward.2} parent=67 // pred_fallthru
          _
        // Predicated region
        $region85: #{clip_combined_forward.2} parent=67 // pred_check
          %p1390 = pneg %p354
        $region86: #{clip_combined_forward.2} parent=67 // pred_check_branch
          %1392 = sbr.rel (%p1390) target = $region88
        $region87: #{clip_combined_forward.2} parent=67 // pred_region
          _
        $region88: #{clip_combined_forward.2} parent=67 // pred_fallthru
          _
        // Predicated region
        $region89: #{clip_combined_forward.2} parent=67 // pred_check
          %p1393 = pneg %p328
        $region90: #{clip_combined_forward.2} parent=67 // pred_check_branch
          %1395 = sbr.rel (%p1393) target = $region92
        $region91: #{clip_combined_forward.2} parent=67 // pred_region
          %p1396 = scmp.lt.s32.totalorder %s33, 0
          %s1397 = scalar_select %p1396, %s33, 0
          %s1398 = smul.addr %s1397, 8
          %s1399 = scalar_lea.vmem %s12, %s1398
        $region92: #{clip_combined_forward.2} parent=67 // pred_fallthru
          _
        // Predicated region
        $region93: #{clip_combined_forward.2} parent=67 // pred_check
          %p1400 = pneg %p354
        $region94: #{clip_combined_forward.2} parent=67 // pred_check_branch
          %1402 = sbr.rel (%p1400) target = $region96
        $region95: #{clip_combined_forward.2} parent=67 // pred_region
          %p1403 = scmp.lt.s32.totalorder %s33, 0
          %s1404 = scalar_select %p1403, %s33, 0
          %s1405 = smul.addr %s1404, 8
          %s1406 = scalar_lea.vmem %s13, %s1405
        $region96: #{clip_combined_forward.2} parent=67 // pred_fallthru
          _
      $region68: #{clip_combined_forward.2} parent=5 // pred_fallthru
        _
      %p1407 = scmp.le.s32.totalorder 2, %s24
      // Predicated region
      $region97: #{clip_combined_forward.2} parent=5 // pred_check
        %p1408 = pneg %p1407
      $region98: #{clip_combined_forward.2} parent=5 // pred_check_branch
        %1410 = sbr.rel (%p1408) target = $region100
      $region99: #{clip_combined_forward.2} parent=5 // pred_region
        %s1411 = ssub.s32 %s24, 2
      $region100: #{clip_combined_forward.2} parent=5 // pred_fallthru
        _
    $region6: #{clip_combined_forward.2} parent=1 // loop_footer
      %s28 = sadd.s32 1, %s24
    $region7: #{clip_combined_forward.2} parent=1 // loop_footer_branch
      %23 = sbr.rel target = $region3
    $region8: #{clip_combined_forward.2} parent=1 // loop_exit
      _
    %1412 = vsyncpa [#allocation5], 1
    %s1413 = scalar_lea.sflag [#allocation5], 1
    %1414 = vsyncpa %s1413, 1

</llo_original>
